<compile_context>
chip_gen: v6e
topology: v6e:2x2x1
jax: 0.10.0
libtpu: 0.0.40
codegen_flags: <defaults>
</compile_context>

<pallas_src>
import math

import jax
import jax.numpy as jnp
from jax.experimental import pallas as pl
from jax.experimental.pallas import tpu as pltpu


FEAT = 32           # trunk width (output channels of every stage)
K = 5               # conv kernel size (odd, 'same' padding)
C = FEAT            # per-stage input channels (stem input zero-padded to C)
PAD = (K - 1) // 2


# ----------------------------------------------------------------------------
# Fully fused 5-stage trunk kernel
# ----------------------------------------------------------------------------
def _make_trunk_kernel(L):
    def kernel(x_ref,
               w0, s0, b0, w1, s1, b1, w2, s2, b2, w3, s3, b3, w4, s4, b4,
               out_ref, cols_ref):
        # Zero the im2col scratch once per invocation.  Only the (static)
        # halo columns keep these zeros; every stage rewrites the data
        # columns, so the 'same'-padding zeros persist across stages.
        cols_ref[...] = jnp.zeros_like(cols_ref)

        def im2col(a):
            # a: (C, L) bf16.  Row block k of cols holds a shifted by
            # d = k - PAD:  cols[k*C + c, t] = a[c, t + d]  (zero outside).
            for k in range(K):
                d = k - PAD
                rows = slice(k * C, (k + 1) * C)
                if d == 0:
                    cols_ref[rows, :] = a
                elif d > 0:
                    cols_ref[rows, 0:L - d] = a[:, d:L]
                else:
                    cols_ref[rows, -d:L] = a[:, 0:L + d]

        def conv_stage(a_f32, w_ref, scale_ref, shift_ref, residual=None):
            # Conv1d('same') + folded inference-BN + optional residual + ReLU,
            # as a single MXU matmul (contraction depth K*C) with an f32
            # epilogue; everything stays in VMEM.
            im2col(a_f32.astype(jnp.bfloat16))
            y = jnp.dot(w_ref[...], cols_ref[...],
                        preferred_element_type=jnp.float32)
            y = y * scale_ref[...] + shift_ref[...]
            if residual is not None:
                y = y + residual
            return jnp.maximum(y, 0.0)

        x = x_ref[0].astype(jnp.float32)                 # (C, L)
        h = conv_stage(x, w0, s0, b0)                    # stem
        h1 = conv_stage(h, w1, s1, b1)                   # block-1 conv-1
        x1 = conv_stage(h1, w2, s2, b2, residual=h)      # block-1 conv-2
        h2 = conv_stage(x1, w3, s3, b3)                  # block-2 conv-1
        x2 = conv_stage(h2, w4, s4, b4, residual=x1)     # block-2 conv-2

        # EcgResnet.forward returns only the un-pooled branch-2 feature map;
        # the AveragePool means are discarded upstream, so they are not
        # computed here (perf review).
        out_ref[0] = x2.astype(out_ref.dtype)

    return kernel


# ----------------------------------------------------------------------------
# EcgResnet forward (flatten = Identity, fc1/fc2 = AveragePool)
# ----------------------------------------------------------------------------
def ecg_resnet_forward(x, params):
    """EcgResnet.forward: `_, (out, _) = self.resnet(x); return out`."""
    B, c_in, L = x.shape
    assert L % 128 == 0, "keep the signal length lane-dense"
    assert c_in <= C
    # One-time glue: bf16 activations, zero-pad the ECG leads up to the trunk
    # width so every stage shares the same dense (FEAT, K*C) matmul shape.
    x = jnp.pad(x.astype(jnp.bfloat16), ((0, 0), (0, C - c_in), (0, 0)))

    stage_names = ("stem", "b1c1", "b1c2", "b2c1", "b2c2")
    inputs = [x]
    in_specs = [pl.BlockSpec((1, C, L), lambda b: (b, 0, 0))]
    for name in stage_names:
        p = params[name]
        w2d = p["w"].reshape(FEAT, K * C).astype(jnp.bfloat16)
        inputs += [w2d,
                   p["scale"].astype(jnp.float32),
                   p["shift"].astype(jnp.float32)]
        in_specs += [pl.BlockSpec((FEAT, K * C), lambda b: (0, 0)),
                     pl.BlockSpec((FEAT, 1), lambda b: (0, 0)),
                     pl.BlockSpec((FEAT, 1), lambda b: (0, 0))]

    out_shape = jax.ShapeDtypeStruct((B, FEAT, L), jnp.float32)

    flops = 2 * B * len(stage_names) * FEAT * (K * C) * L
    bytes_accessed = (sum(int(a.size) * a.dtype.itemsize for a in inputs)
                      + B * FEAT * L * 4)

    return pl.pallas_call(
        _make_trunk_kernel(L),
        out_shape=out_shape,
        grid=(B,),
        in_specs=in_specs,
        out_specs=pl.BlockSpec((1, FEAT, L), lambda b: (b, 0, 0)),
        scratch_shapes=[pltpu.VMEM((K * C, L), jnp.bfloat16)],
        compiler_params=pltpu.CompilerParams(
            dimension_semantics=("parallel",),
            vmem_limit_bytes=32 * 1024 * 1024),
        cost_estimate=pl.CostEstimate(
            flops=int(flops), transcendentals=0,
            bytes_accessed=int(bytes_accessed)),
    )(*inputs)


# ----------------------------------------------------------------------------
# Deterministic parameter init (conv weights + folded inference BatchNorm)
# ----------------------------------------------------------------------------
def init_conv_params(key, c_in, c_out):
    kw, kg, kb, km, kv = jax.random.split(key, 5)
    bound = 1.0 / math.sqrt(c_in * K)
    w = jax.random.uniform(kw, (c_out, K, c_in), jnp.float32, -bound, bound)
    # zero-pad unused input channels (stem only); store bf16 (MXU operand)
    w = jnp.pad(w, ((0, 0), (0, 0), (0, C - c_in))).astype(jnp.bfloat16)
    gamma = jax.random.uniform(kg, (c_out,), jnp.float32, 0.5, 1.5)
    beta = jax.random.uniform(kb, (c_out,), jnp.float32, -0.1, 0.1)
    mean = jax.random.uniform(km, (c_out,), jnp.float32, -0.1, 0.1)
    var = jax.random.uniform(kv, (c_out,), jnp.float32, 0.5, 1.5)
    scale = gamma / jnp.sqrt(var + 1e-5)
    shift = beta - mean * scale
    return {"w": w, "scale": scale.reshape(c_out, 1),
            "shift": shift.reshape(c_out, 1)}


# ----------------------------------------------------------------------------
# Plain-JAX reference (same math: bf16 matmul operands, f32 epilogue/residual)
# ----------------------------------------------------------------------------
def _shift_ref(a, d):
    L = a.shape[-1]
    if d == 0:
        return a
    z = jnp.zeros(a.shape[:-1] + (abs(d),), a.dtype)
    if d > 0:
        return jnp.concatenate([a[..., d:], z], axis=-1)
    return jnp.concatenate([z, a[..., :L + d]], axis=-1)


def _conv_stage_ref(a, p, residual=None):
    w = p["w"].astype(jnp.float32)                     # (C_out, K, C), bf16 vals
    a_bf = a.astype(jnp.bfloat16).astype(jnp.float32)  # matmul operand rounding
    y = jnp.zeros((a.shape[0], w.shape[0], a.shape[-1]), jnp.float32)
    for k in range(K):
        y = y + jnp.einsum("oc,bcl->bol", w[:, k, :],
                           _shift_ref(a_bf, k - PAD),
                           precision=jax.lax.Precision.HIGHEST)
    y = y * p["scale"][None] + p["shift"][None]
    if residual is not None:
        y = y + residual
    return jnp.maximum(y, 0.0)


def _ecg_resnet_ref(x, params):
    B, c_in, L = x.shape
    x = jnp.pad(x.astype(jnp.bfloat16).astype(jnp.float32),
                ((0, 0), (0, C - c_in), (0, 0)))
    h = _conv_stage_ref(x, params["stem"])
    h1 = _conv_stage_ref(h, params["b1c1"])
    x1 = _conv_stage_ref(h1, params["b1c2"], residual=h)
    h2 = _conv_stage_ref(x1, params["b2c1"])
    return _conv_stage_ref(h2, params["b2c2"], residual=x1)


if __name__ == "__main__":
    # Small shapes: batch=2, 4 ECG leads, signal length 256 (lane-dense),
    # 32 feature channels, conv kernel size 5.
    B, C_IN, L = 2, 4, 256

    key = jax.random.PRNGKey(0)
    kx, k1, k2, k3, k4, k5 = jax.random.split(key, 6)
    x = jax.random.normal(kx, (B, C_IN, L), jnp.float32)
    params = {
        "stem": init_conv_params(k1, C_IN, FEAT),
        "b1c1": init_conv_params(k2, FEAT, FEAT),
        "b1c2": init_conv_params(k3, FEAT, FEAT),
        "b2c1": init_conv_params(k4, FEAT, FEAT),
        "b2c2": init_conv_params(k5, FEAT, FEAT),
    }

    fwd = jax.jit(lambda inp: ecg_resnet_forward(inp, params))
    out = jax.block_until_ready(fwd(x))

    ref = _ecg_resnet_ref(x, params)
    assert out.shape == (B, FEAT, L)
    assert bool(jnp.all(jnp.isfinite(out)))
    assert jnp.allclose(out, ref, atol=5e-2, rtol=5e-2), \
        float(jnp.max(jnp.abs(out - ref)))

    print("KERNEL_OK")
</pallas_src>

<mosaic_0001>
module attributes {stable_mosaic.version = 11 : i64} {
  func.func @kernel(%arg0: i32, %arg1: memref<1x32x256xbf16, #tpu.memory_space<vmem>>, %arg2: memref<32x160xbf16, #tpu.memory_space<vmem>>, %arg3: memref<32x1xf32, #tpu.memory_space<vmem>>, %arg4: memref<32x1xf32, #tpu.memory_space<vmem>>, %arg5: memref<32x160xbf16, #tpu.memory_space<vmem>>, %arg6: memref<32x1xf32, #tpu.memory_space<vmem>>, %arg7: memref<32x1xf32, #tpu.memory_space<vmem>>, %arg8: memref<32x160xbf16, #tpu.memory_space<vmem>>, %arg9: memref<32x1xf32, #tpu.memory_space<vmem>>, %arg10: memref<32x1xf32, #tpu.memory_space<vmem>>, %arg11: memref<32x160xbf16, #tpu.memory_space<vmem>>, %arg12: memref<32x1xf32, #tpu.memory_space<vmem>>, %arg13: memref<32x1xf32, #tpu.memory_space<vmem>>, %arg14: memref<32x160xbf16, #tpu.memory_space<vmem>>, %arg15: memref<32x1xf32, #tpu.memory_space<vmem>>, %arg16: memref<32x1xf32, #tpu.memory_space<vmem>>, %arg17: memref<1x32x256xf32, #tpu.memory_space<vmem>>, %arg18: memref<160x256xbf16, #tpu.memory_space<vmem>>) attributes {dimension_semantics = [#tpu.dimension_semantics<parallel>], iteration_bounds = array<i64: 2>, scalar_prefetch = 0 : i64, scratch_operands = 1 : i64, tpu.core_type = #tpu.core_type<tc>, window_params = [{transform_indices = @transform_0, window_bounds = array<i64: 1, 32, 256>}, {pipeline_mode = #tpu.pipeline_mode<synchronous>, transform_indices = @transform_1, window_bounds = array<i64: 32, 160>}, {pipeline_mode = #tpu.pipeline_mode<synchronous>, transform_indices = @transform_2, window_bounds = array<i64: 32, 1>}, {pipeline_mode = #tpu.pipeline_mode<synchronous>, transform_indices = @transform_3, window_bounds = array<i64: 32, 1>}, {pipeline_mode = #tpu.pipeline_mode<synchronous>, transform_indices = @transform_4, window_bounds = array<i64: 32, 160>}, {pipeline_mode = #tpu.pipeline_mode<synchronous>, transform_indices = @transform_5, window_bounds = array<i64: 32, 1>}, {pipeline_mode = #tpu.pipeline_mode<synchronous>, transform_indices = @transform_6, window_bounds = array<i64: 32, 1>}, {pipeline_mode = #tpu.pipeline_mode<synchronous>, transform_indices = @transform_7, window_bounds = array<i64: 32, 160>}, {pipeline_mode = #tpu.pipeline_mode<synchronous>, transform_indices = @transform_8, window_bounds = array<i64: 32, 1>}, {pipeline_mode = #tpu.pipeline_mode<synchronous>, transform_indices = @transform_9, window_bounds = array<i64: 32, 1>}, {pipeline_mode = #tpu.pipeline_mode<synchronous>, transform_indices = @transform_10, window_bounds = array<i64: 32, 160>}, {pipeline_mode = #tpu.pipeline_mode<synchronous>, transform_indices = @transform_11, window_bounds = array<i64: 32, 1>}, {pipeline_mode = #tpu.pipeline_mode<synchronous>, transform_indices = @transform_12, window_bounds = array<i64: 32, 1>}, {pipeline_mode = #tpu.pipeline_mode<synchronous>, transform_indices = @transform_13, window_bounds = array<i64: 32, 160>}, {pipeline_mode = #tpu.pipeline_mode<synchronous>, transform_indices = @transform_14, window_bounds = array<i64: 32, 1>}, {pipeline_mode = #tpu.pipeline_mode<synchronous>, transform_indices = @transform_15, window_bounds = array<i64: 32, 1>}, {transform_indices = @transform_16, window_bounds = array<i64: 1, 32, 256>}]} {
    %cst = arith.constant 0.000000e+00 : bf16
    %0 = vector.broadcast %cst : bf16 to vector<160x256xbf16>
    %c0 = arith.constant 0 : index
    %c0_0 = arith.constant 0 : index
    %1 = vector.load %arg18[%c0, %c0_0] : memref<160x256xbf16, #tpu.memory_space<vmem>>, vector<160x256xbf16>
    tpu.vector_store %arg18[%c0, %c0_0], %0 {strides = array<i32>} : memref<160x256xbf16, #tpu.memory_space<vmem>>, vector<160x256xbf16>,
    %c0_1 = arith.constant 0 : index
    %c0_2 = arith.constant 0 : index
    %c0_3 = arith.constant 0 : index
    %2 = vector.load %arg1[%c0_1, %c0_2, %c0_3] : memref<1x32x256xbf16, #tpu.memory_space<vmem>>, vector<1x32x256xbf16>
    %3 = vector.shape_cast %2 : vector<1x32x256xbf16> to vector<32x256xbf16>
    %4 = arith.extf %3 : vector<32x256xbf16> to vector<32x256xf32>
    %5 = arith.truncf %4 : vector<32x256xf32> to vector<32x256xbf16>
    %6 = vector.extract_strided_slice %5 {offsets = [0, 0], sizes = [32, 254], strides = [1, 1]} : vector<32x256xbf16> to vector<32x254xbf16>
    %c0_4 = arith.constant 0 : index
    %c2 = arith.constant 2 : index
    %7 = vector.load %arg18[%c0_4, %c2] : memref<160x256xbf16, #tpu.memory_space<vmem>>, vector<32x254xbf16>
    tpu.vector_store %arg18[%c0_4, %c2], %6 {strides = array<i32>} : memref<160x256xbf16, #tpu.memory_space<vmem>>, vector<32x254xbf16>,
    %8 = vector.extract_strided_slice %5 {offsets = [0, 0], sizes = [32, 255], strides = [1, 1]} : vector<32x256xbf16> to vector<32x255xbf16>
    %c32 = arith.constant 32 : index
    %c1 = arith.constant 1 : index
    %9 = vector.load %arg18[%c32, %c1] : memref<160x256xbf16, #tpu.memory_space<vmem>>, vector<32x255xbf16>
    tpu.vector_store %arg18[%c32, %c1], %8 {strides = array<i32>} : memref<160x256xbf16, #tpu.memory_space<vmem>>, vector<32x255xbf16>,
    %c64 = arith.constant 64 : index
    %c0_5 = arith.constant 0 : index
    %10 = vector.load %arg18[%c64, %c0_5] : memref<160x256xbf16, #tpu.memory_space<vmem>>, vector<32x256xbf16>
    tpu.vector_store %arg18[%c64, %c0_5], %5 {strides = array<i32>} : memref<160x256xbf16, #tpu.memory_space<vmem>>, vector<32x256xbf16>,
    %11 = vector.extract_strided_slice %5 {offsets = [0, 1], sizes = [32, 255], strides = [1, 1]} : vector<32x256xbf16> to vector<32x255xbf16>
    %c96 = arith.constant 96 : index
    %c0_6 = arith.constant 0 : index
    %12 = vector.load %arg18[%c96, %c0_6] : memref<160x256xbf16, #tpu.memory_space<vmem>>, vector<32x255xbf16>
    tpu.vector_store %arg18[%c96, %c0_6], %11 {strides = array<i32>} : memref<160x256xbf16, #tpu.memory_space<vmem>>, vector<32x255xbf16>,
    %13 = vector.extract_strided_slice %5 {offsets = [0, 2], sizes = [32, 254], strides = [1, 1]} : vector<32x256xbf16> to vector<32x254xbf16>
    %c128 = arith.constant 128 : index
    %c0_7 = arith.constant 0 : index
    %14 = vector.load %arg18[%c128, %c0_7] : memref<160x256xbf16, #tpu.memory_space<vmem>>, vector<32x254xbf16>
    tpu.vector_store %arg18[%c128, %c0_7], %13 {strides = array<i32>} : memref<160x256xbf16, #tpu.memory_space<vmem>>, vector<32x254xbf16>,
    %c0_8 = arith.constant 0 : index
    %c0_9 = arith.constant 0 : index
    %15 = vector.load %arg2[%c0_8, %c0_9] : memref<32x160xbf16, #tpu.memory_space<vmem>>, vector<32x160xbf16>
    %c0_10 = arith.constant 0 : index
    %c0_11 = arith.constant 0 : index
    %16 = vector.load %arg18[%c0_10, %c0_11] : memref<160x256xbf16, #tpu.memory_space<vmem>>, vector<160x256xbf16>
    %cst_12 = arith.constant dense<0.000000e+00> : vector<32x256xf32>
    %17 = tpu.matmul %15, %16, %cst_12 {dimension_numbers = #tpu.dot_dimension_numbers<[1], [0], [0], [1], [0, 0, 1, 1], [], []>} : vector<32x160xbf16>, vector<160x256xbf16>, vector<32x256xf32> -> vector<32x256xf32>
    %c0_13 = arith.constant 0 : index
    %c0_14 = arith.constant 0 : index
    %18 = vector.load %arg3[%c0_13, %c0_14] : memref<32x1xf32, #tpu.memory_space<vmem>>, vector<32x1xf32>
    %19 = vector.broadcast %18 : vector<32x1xf32> to vector<32x256xf32>
    %20 = arith.mulf %17, %19 : vector<32x256xf32>
    %c0_15 = arith.constant 0 : index
    %c0_16 = arith.constant 0 : index
    %21 = vector.load %arg4[%c0_15, %c0_16] : memref<32x1xf32, #tpu.memory_space<vmem>>, vector<32x1xf32>
    %22 = vector.broadcast %21 : vector<32x1xf32> to vector<32x256xf32>
    %23 = arith.addf %20, %22 : vector<32x256xf32>
    %cst_17 = arith.constant 0.000000e+00 : f32
    %24 = vector.broadcast %cst_17 : f32 to vector<32x256xf32>
    %25 = arith.maximumf %23, %24 : vector<32x256xf32>
    %26 = arith.truncf %25 : vector<32x256xf32> to vector<32x256xbf16>
    %27 = vector.extract_strided_slice %26 {offsets = [0, 0], sizes = [32, 254], strides = [1, 1]} : vector<32x256xbf16> to vector<32x254xbf16>
    %c0_18 = arith.constant 0 : index
    %c2_19 = arith.constant 2 : index
    %28 = vector.load %arg18[%c0_18, %c2_19] : memref<160x256xbf16, #tpu.memory_space<vmem>>, vector<32x254xbf16>
    tpu.vector_store %arg18[%c0_18, %c2_19], %27 {strides = array<i32>} : memref<160x256xbf16, #tpu.memory_space<vmem>>, vector<32x254xbf16>,
    %29 = vector.extract_strided_slice %26 {offsets = [0, 0], sizes = [32, 255], strides = [1, 1]} : vector<32x256xbf16> to vector<32x255xbf16>
    %c32_20 = arith.constant 32 : index
    %c1_21 = arith.constant 1 : index
    %30 = vector.load %arg18[%c32_20, %c1_21] : memref<160x256xbf16, #tpu.memory_space<vmem>>, vector<32x255xbf16>
    tpu.vector_store %arg18[%c32_20, %c1_21], %29 {strides = array<i32>} : memref<160x256xbf16, #tpu.memory_space<vmem>>, vector<32x255xbf16>,
    %c64_22 = arith.constant 64 : index
    %c0_23 = arith.constant 0 : index
    %31 = vector.load %arg18[%c64_22, %c0_23] : memref<160x256xbf16, #tpu.memory_space<vmem>>, vector<32x256xbf16>
    tpu.vector_store %arg18[%c64_22, %c0_23], %26 {strides = array<i32>} : memref<160x256xbf16, #tpu.memory_space<vmem>>, vector<32x256xbf16>,
    %32 = vector.extract_strided_slice %26 {offsets = [0, 1], sizes = [32, 255], strides = [1, 1]} : vector<32x256xbf16> to vector<32x255xbf16>
    %c96_24 = arith.constant 96 : index
    %c0_25 = arith.constant 0 : index
    %33 = vector.load %arg18[%c96_24, %c0_25] : memref<160x256xbf16, #tpu.memory_space<vmem>>, vector<32x255xbf16>
    tpu.vector_store %arg18[%c96_24, %c0_25], %32 {strides = array<i32>} : memref<160x256xbf16, #tpu.memory_space<vmem>>, vector<32x255xbf16>,
    %34 = vector.extract_strided_slice %26 {offsets = [0, 2], sizes = [32, 254], strides = [1, 1]} : vector<32x256xbf16> to vector<32x254xbf16>
    %c128_26 = arith.constant 128 : index
    %c0_27 = arith.constant 0 : index
    %35 = vector.load %arg18[%c128_26, %c0_27] : memref<160x256xbf16, #tpu.memory_space<vmem>>, vector<32x254xbf16>
    tpu.vector_store %arg18[%c128_26, %c0_27], %34 {strides = array<i32>} : memref<160x256xbf16, #tpu.memory_space<vmem>>, vector<32x254xbf16>,
    %c0_28 = arith.constant 0 : index
    %c0_29 = arith.constant 0 : index
    %36 = vector.load %arg5[%c0_28, %c0_29] : memref<32x160xbf16, #tpu.memory_space<vmem>>, vector<32x160xbf16>
    %c0_30 = arith.constant 0 : index
    %c0_31 = arith.constant 0 : index
    %37 = vector.load %arg18[%c0_30, %c0_31] : memref<160x256xbf16, #tpu.memory_space<vmem>>, vector<160x256xbf16>
    %cst_32 = arith.constant dense<0.000000e+00> : vector<32x256xf32>
    %38 = tpu.matmul %36, %37, %cst_32 {dimension_numbers = #tpu.dot_dimension_numbers<[1], [0], [0], [1], [0, 0, 1, 1], [], []>} : vector<32x160xbf16>, vector<160x256xbf16>, vector<32x256xf32> -> vector<32x256xf32>
    %c0_33 = arith.constant 0 : index
    %c0_34 = arith.constant 0 : index
    %39 = vector.load %arg6[%c0_33, %c0_34] : memref<32x1xf32, #tpu.memory_space<vmem>>, vector<32x1xf32>
    %40 = vector.broadcast %39 : vector<32x1xf32> to vector<32x256xf32>
    %41 = arith.mulf %38, %40 : vector<32x256xf32>
    %c0_35 = arith.constant 0 : index
    %c0_36 = arith.constant 0 : index
    %42 = vector.load %arg7[%c0_35, %c0_36] : memref<32x1xf32, #tpu.memory_space<vmem>>, vector<32x1xf32>
    %43 = vector.broadcast %42 : vector<32x1xf32> to vector<32x256xf32>
    %44 = arith.addf %41, %43 : vector<32x256xf32>
    %cst_37 = arith.constant 0.000000e+00 : f32
    %45 = vector.broadcast %cst_37 : f32 to vector<32x256xf32>
    %46 = arith.maximumf %44, %45 : vector<32x256xf32>
    %47 = arith.truncf %46 : vector<32x256xf32> to vector<32x256xbf16>
    %48 = vector.extract_strided_slice %47 {offsets = [0, 0], sizes = [32, 254], strides = [1, 1]} : vector<32x256xbf16> to vector<32x254xbf16>
    %c0_38 = arith.constant 0 : index
    %c2_39 = arith.constant 2 : index
    %49 = vector.load %arg18[%c0_38, %c2_39] : memref<160x256xbf16, #tpu.memory_space<vmem>>, vector<32x254xbf16>
    tpu.vector_store %arg18[%c0_38, %c2_39], %48 {strides = array<i32>} : memref<160x256xbf16, #tpu.memory_space<vmem>>, vector<32x254xbf16>,
    %50 = vector.extract_strided_slice %47 {offsets = [0, 0], sizes = [32, 255], strides = [1, 1]} : vector<32x256xbf16> to vector<32x255xbf16>
    %c32_40 = arith.constant 32 : index
    %c1_41 = arith.constant 1 : index
    %51 = vector.load %arg18[%c32_40, %c1_41] : memref<160x256xbf16, #tpu.memory_space<vmem>>, vector<32x255xbf16>
    tpu.vector_store %arg18[%c32_40, %c1_41], %50 {strides = array<i32>} : memref<160x256xbf16, #tpu.memory_space<vmem>>, vector<32x255xbf16>,
    %c64_42 = arith.constant 64 : index
    %c0_43 = arith.constant 0 : index
    %52 = vector.load %arg18[%c64_42, %c0_43] : memref<160x256xbf16, #tpu.memory_space<vmem>>, vector<32x256xbf16>
    tpu.vector_store %arg18[%c64_42, %c0_43], %47 {strides = array<i32>} : memref<160x256xbf16, #tpu.memory_space<vmem>>, vector<32x256xbf16>,
    %53 = vector.extract_strided_slice %47 {offsets = [0, 1], sizes = [32, 255], strides = [1, 1]} : vector<32x256xbf16> to vector<32x255xbf16>
    %c96_44 = arith.constant 96 : index
    %c0_45 = arith.constant 0 : index
    %54 = vector.load %arg18[%c96_44, %c0_45] : memref<160x256xbf16, #tpu.memory_space<vmem>>, vector<32x255xbf16>
    tpu.vector_store %arg18[%c96_44, %c0_45], %53 {strides = array<i32>} : memref<160x256xbf16, #tpu.memory_space<vmem>>, vector<32x255xbf16>,
    %55 = vector.extract_strided_slice %47 {offsets = [0, 2], sizes = [32, 254], strides = [1, 1]} : vector<32x256xbf16> to vector<32x254xbf16>
    %c128_46 = arith.constant 128 : index
    %c0_47 = arith.constant 0 : index
    %56 = vector.load %arg18[%c128_46, %c0_47] : memref<160x256xbf16, #tpu.memory_space<vmem>>, vector<32x254xbf16>
    tpu.vector_store %arg18[%c128_46, %c0_47], %55 {strides = array<i32>} : memref<160x256xbf16, #tpu.memory_space<vmem>>, vector<32x254xbf16>,
    %c0_48 = arith.constant 0 : index
    %c0_49 = arith.constant 0 : index
    %57 = vector.load %arg8[%c0_48, %c0_49] : memref<32x160xbf16, #tpu.memory_space<vmem>>, vector<32x160xbf16>
    %c0_50 = arith.constant 0 : index
    %c0_51 = arith.constant 0 : index
    %58 = vector.load %arg18[%c0_50, %c0_51] : memref<160x256xbf16, #tpu.memory_space<vmem>>, vector<160x256xbf16>
    %cst_52 = arith.constant dense<0.000000e+00> : vector<32x256xf32>
    %59 = tpu.matmul %57, %58, %cst_52 {dimension_numbers = #tpu.dot_dimension_numbers<[1], [0], [0], [1], [0, 0, 1, 1], [], []>} : vector<32x160xbf16>, vector<160x256xbf16>, vector<32x256xf32> -> vector<32x256xf32>
    %c0_53 = arith.constant 0 : index
    %c0_54 = arith.constant 0 : index
    %60 = vector.load %arg9[%c0_53, %c0_54] : memref<32x1xf32, #tpu.memory_space<vmem>>, vector<32x1xf32>
    %61 = vector.broadcast %60 : vector<32x1xf32> to vector<32x256xf32>
    %62 = arith.mulf %59, %61 : vector<32x256xf32>
    %c0_55 = arith.constant 0 : index
    %c0_56 = arith.constant 0 : index
    %63 = vector.load %arg10[%c0_55, %c0_56] : memref<32x1xf32, #tpu.memory_space<vmem>>, vector<32x1xf32>
    %64 = vector.broadcast %63 : vector<32x1xf32> to vector<32x256xf32>
    %65 = arith.addf %62, %64 : vector<32x256xf32>
    %66 = arith.addf %65, %25 : vector<32x256xf32>
    %cst_57 = arith.constant 0.000000e+00 : f32
    %67 = vector.broadcast %cst_57 : f32 to vector<32x256xf32>
    %68 = arith.maximumf %66, %67 : vector<32x256xf32>
    %69 = arith.truncf %68 : vector<32x256xf32> to vector<32x256xbf16>
    %70 = vector.extract_strided_slice %69 {offsets = [0, 0], sizes = [32, 254], strides = [1, 1]} : vector<32x256xbf16> to vector<32x254xbf16>
    %c0_58 = arith.constant 0 : index
    %c2_59 = arith.constant 2 : index
    %71 = vector.load %arg18[%c0_58, %c2_59] : memref<160x256xbf16, #tpu.memory_space<vmem>>, vector<32x254xbf16>
    tpu.vector_store %arg18[%c0_58, %c2_59], %70 {strides = array<i32>} : memref<160x256xbf16, #tpu.memory_space<vmem>>, vector<32x254xbf16>,
    %72 = vector.extract_strided_slice %69 {offsets = [0, 0], sizes = [32, 255], strides = [1, 1]} : vector<32x256xbf16> to vector<32x255xbf16>
    %c32_60 = arith.constant 32 : index
    %c1_61 = arith.constant 1 : index
    %73 = vector.load %arg18[%c32_60, %c1_61] : memref<160x256xbf16, #tpu.memory_space<vmem>>, vector<32x255xbf16>
    tpu.vector_store %arg18[%c32_60, %c1_61], %72 {strides = array<i32>} : memref<160x256xbf16, #tpu.memory_space<vmem>>, vector<32x255xbf16>,
    %c64_62 = arith.constant 64 : index
    %c0_63 = arith.constant 0 : index
    %74 = vector.load %arg18[%c64_62, %c0_63] : memref<160x256xbf16, #tpu.memory_space<vmem>>, vector<32x256xbf16>
    tpu.vector_store %arg18[%c64_62, %c0_63], %69 {strides = array<i32>} : memref<160x256xbf16, #tpu.memory_space<vmem>>, vector<32x256xbf16>,
    %75 = vector.extract_strided_slice %69 {offsets = [0, 1], sizes = [32, 255], strides = [1, 1]} : vector<32x256xbf16> to vector<32x255xbf16>
    %c96_64 = arith.constant 96 : index
    %c0_65 = arith.constant 0 : index
    %76 = vector.load %arg18[%c96_64, %c0_65] : memref<160x256xbf16, #tpu.memory_space<vmem>>, vector<32x255xbf16>
    tpu.vector_store %arg18[%c96_64, %c0_65], %75 {strides = array<i32>} : memref<160x256xbf16, #tpu.memory_space<vmem>>, vector<32x255xbf16>,
    %77 = vector.extract_strided_slice %69 {offsets = [0, 2], sizes = [32, 254], strides = [1, 1]} : vector<32x256xbf16> to vector<32x254xbf16>
    %c128_66 = arith.constant 128 : index
    %c0_67 = arith.constant 0 : index
    %78 = vector.load %arg18[%c128_66, %c0_67] : memref<160x256xbf16, #tpu.memory_space<vmem>>, vector<32x254xbf16>
    tpu.vector_store %arg18[%c128_66, %c0_67], %77 {strides = array<i32>} : memref<160x256xbf16, #tpu.memory_space<vmem>>, vector<32x254xbf16>,
    %c0_68 = arith.constant 0 : index
    %c0_69 = arith.constant 0 : index
    %79 = vector.load %arg11[%c0_68, %c0_69] : memref<32x160xbf16, #tpu.memory_space<vmem>>, vector<32x160xbf16>
    %c0_70 = arith.constant 0 : index
    %c0_71 = arith.constant 0 : index
    %80 = vector.load %arg18[%c0_70, %c0_71] : memref<160x256xbf16, #tpu.memory_space<vmem>>, vector<160x256xbf16>
    %cst_72 = arith.constant dense<0.000000e+00> : vector<32x256xf32>
    %81 = tpu.matmul %79, %80, %cst_72 {dimension_numbers = #tpu.dot_dimension_numbers<[1], [0], [0], [1], [0, 0, 1, 1], [], []>} : vector<32x160xbf16>, vector<160x256xbf16>, vector<32x256xf32> -> vector<32x256xf32>
    %c0_73 = arith.constant 0 : index
    %c0_74 = arith.constant 0 : index
    %82 = vector.load %arg12[%c0_73, %c0_74] : memref<32x1xf32, #tpu.memory_space<vmem>>, vector<32x1xf32>
    %83 = vector.broadcast %82 : vector<32x1xf32> to vector<32x256xf32>
    %84 = arith.mulf %81, %83 : vector<32x256xf32>
    %c0_75 = arith.constant 0 : index
    %c0_76 = arith.constant 0 : index
    %85 = vector.load %arg13[%c0_75, %c0_76] : memref<32x1xf32, #tpu.memory_space<vmem>>, vector<32x1xf32>
    %86 = vector.broadcast %85 : vector<32x1xf32> to vector<32x256xf32>
    %87 = arith.addf %84, %86 : vector<32x256xf32>
    %cst_77 = arith.constant 0.000000e+00 : f32
    %88 = vector.broadcast %cst_77 : f32 to vector<32x256xf32>
    %89 = arith.maximumf %87, %88 : vector<32x256xf32>
    %90 = arith.truncf %89 : vector<32x256xf32> to vector<32x256xbf16>
    %91 = vector.extract_strided_slice %90 {offsets = [0, 0], sizes = [32, 254], strides = [1, 1]} : vector<32x256xbf16> to vector<32x254xbf16>
    %c0_78 = arith.constant 0 : index
    %c2_79 = arith.constant 2 : index
    %92 = vector.load %arg18[%c0_78, %c2_79] : memref<160x256xbf16, #tpu.memory_space<vmem>>, vector<32x254xbf16>
    tpu.vector_store %arg18[%c0_78, %c2_79], %91 {strides = array<i32>} : memref<160x256xbf16, #tpu.memory_space<vmem>>, vector<32x254xbf16>,
    %93 = vector.extract_strided_slice %90 {offsets = [0, 0], sizes = [32, 255], strides = [1, 1]} : vector<32x256xbf16> to vector<32x255xbf16>
    %c32_80 = arith.constant 32 : index
    %c1_81 = arith.constant 1 : index
    %94 = vector.load %arg18[%c32_80, %c1_81] : memref<160x256xbf16, #tpu.memory_space<vmem>>, vector<32x255xbf16>
    tpu.vector_store %arg18[%c32_80, %c1_81], %93 {strides = array<i32>} : memref<160x256xbf16, #tpu.memory_space<vmem>>, vector<32x255xbf16>,
    %c64_82 = arith.constant 64 : index
    %c0_83 = arith.constant 0 : index
    %95 = vector.load %arg18[%c64_82, %c0_83] : memref<160x256xbf16, #tpu.memory_space<vmem>>, vector<32x256xbf16>
    tpu.vector_store %arg18[%c64_82, %c0_83], %90 {strides = array<i32>} : memref<160x256xbf16, #tpu.memory_space<vmem>>, vector<32x256xbf16>,
    %96 = vector.extract_strided_slice %90 {offsets = [0, 1], sizes = [32, 255], strides = [1, 1]} : vector<32x256xbf16> to vector<32x255xbf16>
    %c96_84 = arith.constant 96 : index
    %c0_85 = arith.constant 0 : index
    %97 = vector.load %arg18[%c96_84, %c0_85] : memref<160x256xbf16, #tpu.memory_space<vmem>>, vector<32x255xbf16>
    tpu.vector_store %arg18[%c96_84, %c0_85], %96 {strides = array<i32>} : memref<160x256xbf16, #tpu.memory_space<vmem>>, vector<32x255xbf16>,
    %98 = vector.extract_strided_slice %90 {offsets = [0, 2], sizes = [32, 254], strides = [1, 1]} : vector<32x256xbf16> to vector<32x254xbf16>
    %c128_86 = arith.constant 128 : index
    %c0_87 = arith.constant 0 : index
    %99 = vector.load %arg18[%c128_86, %c0_87] : memref<160x256xbf16, #tpu.memory_space<vmem>>, vector<32x254xbf16>
    tpu.vector_store %arg18[%c128_86, %c0_87], %98 {strides = array<i32>} : memref<160x256xbf16, #tpu.memory_space<vmem>>, vector<32x254xbf16>,
    %c0_88 = arith.constant 0 : index
    %c0_89 = arith.constant 0 : index
    %100 = vector.load %arg14[%c0_88, %c0_89] : memref<32x160xbf16, #tpu.memory_space<vmem>>, vector<32x160xbf16>
    %c0_90 = arith.constant 0 : index
    %c0_91 = arith.constant 0 : index
    %101 = vector.load %arg18[%c0_90, %c0_91] : memref<160x256xbf16, #tpu.memory_space<vmem>>, vector<160x256xbf16>
    %cst_92 = arith.constant dense<0.000000e+00> : vector<32x256xf32>
    %102 = tpu.matmul %100, %101, %cst_92 {dimension_numbers = #tpu.dot_dimension_numbers<[1], [0], [0], [1], [0, 0, 1, 1], [], []>} : vector<32x160xbf16>, vector<160x256xbf16>, vector<32x256xf32> -> vector<32x256xf32>
    %c0_93 = arith.constant 0 : index
    %c0_94 = arith.constant 0 : index
    %103 = vector.load %arg15[%c0_93, %c0_94] : memref<32x1xf32, #tpu.memory_space<vmem>>, vector<32x1xf32>
    %104 = vector.broadcast %103 : vector<32x1xf32> to vector<32x256xf32>
    %105 = arith.mulf %102, %104 : vector<32x256xf32>
    %c0_95 = arith.constant 0 : index
    %c0_96 = arith.constant 0 : index
    %106 = vector.load %arg16[%c0_95, %c0_96] : memref<32x1xf32, #tpu.memory_space<vmem>>, vector<32x1xf32>
    %107 = vector.broadcast %106 : vector<32x1xf32> to vector<32x256xf32>
    %108 = arith.addf %105, %107 : vector<32x256xf32>
    %109 = arith.addf %108, %68 : vector<32x256xf32>
    %cst_97 = arith.constant 0.000000e+00 : f32
    %110 = vector.broadcast %cst_97 : f32 to vector<32x256xf32>
    %111 = arith.maximumf %109, %110 : vector<32x256xf32>
    %c0_98 = arith.constant 0 : index
    %c0_99 = arith.constant 0 : index
    %c0_100 = arith.constant 0 : index
    %112 = vector.load %arg17[%c0_98, %c0_99, %c0_100] : memref<1x32x256xf32, #tpu.memory_space<vmem>>, vector<1x32x256xf32>
    %113 = vector.shape_cast %112 : vector<1x32x256xf32> to vector<32x256xf32>
    %114 = vector.shape_cast %111 : vector<32x256xf32> to vector<1x32x256xf32>
    tpu.vector_store %arg17[%c0_98, %c0_99, %c0_100], %114 {strides = array<i32>} : memref<1x32x256xf32, #tpu.memory_space<vmem>>, vector<1x32x256xf32>,
    return
  }
  func.func @transform_0(%arg0: i32) -> (i32, i32, i32) {
    %c0_i32 = arith.constant 0 : i32
    %c0_i32_0 = arith.constant 0 : i32
    %c0_i32_1 = arith.constant 0 : i32
    return %arg0, %c0_i32, %c0_i32_0 : i32, i32, i32
  }
  func.func @transform_1(%arg0: i32) -> (i32, i32) {
    %c0_i32 = arith.constant 0 : i32
    %c0_i32_0 = arith.constant 0 : i32
    %c0_i32_1 = arith.constant 0 : i32
    return %c0_i32, %c0_i32_0 : i32, i32
  }
  func.func @transform_2(%arg0: i32) -> (i32, i32) {
    %c0_i32 = arith.constant 0 : i32
    %c0_i32_0 = arith.constant 0 : i32
    %c0_i32_1 = arith.constant 0 : i32
    return %c0_i32, %c0_i32_0 : i32, i32
  }
  func.func @transform_3(%arg0: i32) -> (i32, i32) {
    %c0_i32 = arith.constant 0 : i32
    %c0_i32_0 = arith.constant 0 : i32
    %c0_i32_1 = arith.constant 0 : i32
    return %c0_i32, %c0_i32_0 : i32, i32
  }
  func.func @transform_4(%arg0: i32) -> (i32, i32) {
    %c0_i32 = arith.constant 0 : i32
    %c0_i32_0 = arith.constant 0 : i32
    %c0_i32_1 = arith.constant 0 : i32
    return %c0_i32, %c0_i32_0 : i32, i32
  }
  func.func @transform_5(%arg0: i32) -> (i32, i32) {
    %c0_i32 = arith.constant 0 : i32
    %c0_i32_0 = arith.constant 0 : i32
    %c0_i32_1 = arith.constant 0 : i32
    return %c0_i32, %c0_i32_0 : i32, i32
  }
  func.func @transform_6(%arg0: i32) -> (i32, i32) {
    %c0_i32 = arith.constant 0 : i32
    %c0_i32_0 = arith.constant 0 : i32
    %c0_i32_1 = arith.constant 0 : i32
    return %c0_i32, %c0_i32_0 : i32, i32
  }
  func.func @transform_7(%arg0: i32) -> (i32, i32) {
    %c0_i32 = arith.constant 0 : i32
    %c0_i32_0 = arith.constant 0 : i32
    %c0_i32_1 = arith.constant 0 : i32
    return %c0_i32, %c0_i32_0 : i32, i32
  }
  func.func @transform_8(%arg0: i32) -> (i32, i32) {
    %c0_i32 = arith.constant 0 : i32
    %c0_i32_0 = arith.constant 0 : i32
    %c0_i32_1 = arith.constant 0 : i32
    return %c0_i32, %c0_i32_0 : i32, i32
  }
  func.func @transform_9(%arg0: i32) -> (i32, i32) {
    %c0_i32 = arith.constant 0 : i32
    %c0_i32_0 = arith.constant 0 : i32
    %c0_i32_1 = arith.constant 0 : i32
    return %c0_i32, %c0_i32_0 : i32, i32
  }
  func.func @transform_10(%arg0: i32) -> (i32, i32) {
    %c0_i32 = arith.constant 0 : i32
    %c0_i32_0 = arith.constant 0 : i32
    %c0_i32_1 = arith.constant 0 : i32
    return %c0_i32, %c0_i32_0 : i32, i32
  }
  func.func @transform_11(%arg0: i32) -> (i32, i32) {
    %c0_i32 = arith.constant 0 : i32
    %c0_i32_0 = arith.constant 0 : i32
    %c0_i32_1 = arith.constant 0 : i32
    return %c0_i32, %c0_i32_0 : i32, i32
  }
  func.func @transform_12(%arg0: i32) -> (i32, i32) {
    %c0_i32 = arith.constant 0 : i32
    %c0_i32_0 = arith.constant 0 : i32
    %c0_i32_1 = arith.constant 0 : i32
    return %c0_i32, %c0_i32_0 : i32, i32
  }
  func.func @transform_13(%arg0: i32) -> (i32, i32) {
    %c0_i32 = arith.constant 0 : i32
    %c0_i32_0 = arith.constant 0 : i32
    %c0_i32_1 = arith.constant 0 : i32
    return %c0_i32, %c0_i32_0 : i32, i32
  }
  func.func @transform_14(%arg0: i32) -> (i32, i32) {
    %c0_i32 = arith.constant 0 : i32
    %c0_i32_0 = arith.constant 0 : i32
    %c0_i32_1 = arith.constant 0 : i32
    return %c0_i32, %c0_i32_0 : i32, i32
  }
  func.func @transform_15(%arg0: i32) -> (i32, i32) {
    %c0_i32 = arith.constant 0 : i32
    %c0_i32_0 = arith.constant 0 : i32
    %c0_i32_1 = arith.constant 0 : i32
    return %c0_i32, %c0_i32_0 : i32, i32
  }
  func.func @transform_16(%arg0: i32) -> (i32, i32, i32) {
    %c0_i32 = arith.constant 0 : i32
    %c0_i32_0 = arith.constant 0 : i32
    %c0_i32_1 = arith.constant 0 : i32
    return %arg0, %c0_i32, %c0_i32_0 : i32, i32, i32
  }
}

</mosaic_0001>

<llo_original>
// kernel: _lambda_.1
$region0: #{_lambda_.1}
  #allocation0 [shape = 'u32[]', space=smem, size = 0x4, offset = 0x4, fixed_abs, tag = 'smem constant byte address 0x4 - core index']
  #allocation1 [shape = 'u32[144,128]{1,0:T(1,128)}', space=vmem, size = 0x12000, scoped, tag = 'internal scratch']
  #allocation2 [shape = 'bf16[160,256]{1,0:T(8,128)(2,1)}', space=vmem, size = 0x14000, scoped, tag = 'scratch operand']
  %s0 = inlined_call_operand.vmem [shape: bf16[2,32,256], index: 0, kind: input, shape index: {}]
  %s1 = inlined_call_operand.hbm [shape: bf16[32,160], index: 1, kind: input, shape index: {}]
  %s2 = inlined_call_operand.hbm [shape: f32[32,1], index: 2, kind: input, shape index: {}]
  %s3 = inlined_call_operand.hbm [shape: f32[32,1], index: 3, kind: input, shape index: {}]
  %s4 = inlined_call_operand.hbm [shape: bf16[32,160], index: 4, kind: input, shape index: {}]
  %s5 = inlined_call_operand.hbm [shape: f32[32,1], index: 5, kind: input, shape index: {}]
  %s6 = inlined_call_operand.hbm [shape: f32[32,1], index: 6, kind: input, shape index: {}]
  %s7 = inlined_call_operand.hbm [shape: bf16[32,160], index: 7, kind: input, shape index: {}]
  %s8 = inlined_call_operand.hbm [shape: f32[32,1], index: 8, kind: input, shape index: {}]
  %s9 = inlined_call_operand.hbm [shape: f32[32,1], index: 9, kind: input, shape index: {}]
  %s10 = inlined_call_operand.hbm [shape: bf16[32,160], index: 10, kind: input, shape index: {}]
  %s11 = inlined_call_operand.hbm [shape: f32[32,1], index: 11, kind: input, shape index: {}]
  %s12 = inlined_call_operand.vmem [shape: f32[32,1], index: 12, kind: input, shape index: {}]
  %s13 = inlined_call_operand.hbm [shape: bf16[32,160], index: 13, kind: input, shape index: {}]
  %s14 = inlined_call_operand.vmem [shape: f32[32,1], index: 14, kind: input, shape index: {}]
  %s15 = inlined_call_operand.vmem [shape: f32[32,1], index: 15, kind: input, shape index: {}]
  %s16 = inlined_call_operand.hbm [shape: f32[2,32,256], index: 16, kind: output, shape index: {}]
  %s17 = sld [smem:[#allocation0]]
  $region145: #{_lambda_.1} parent=0
    _
  %s19 = ssub.s32 1, %s17
  %s20 = scalar_select 0, %s19, %s17
  $region1: #{_lambda_.1} parent=0
    #allocation3 [shape = 'u8[16384]{0}', space=vmem, size = 0x4000, scoped, tag = 'input window, operand 1, single buffered']
    #allocation4 [shape = 's32[2]{0}', space=sflag, size = 0x8, scoped, tag = 'scoped memory for _lambda_.1']
    #allocation5 [shape = 's32[2]{0}', space=sflag, size = 0x8, scoped, tag = 'scoped memory for _lambda_.1']
    #allocation6 [shape = 'u8[16384]{0}', space=vmem, size = 0x4000, scoped, tag = 'input window, operand 2, single buffered']
    #allocation7 [shape = 's32[1]{0}', space=sflag, size = 0x4, scoped, tag = 'scoped memory for _lambda_.1']
    #allocation8 [shape = 'u8[16384]{0}', space=vmem, size = 0x4000, scoped, tag = 'input window, operand 3, single buffered']
    #allocation9 [shape = 'u8[16384]{0}', space=vmem, size = 0x4000, scoped, tag = 'input window, operand 4, single buffered']
    #allocation10 [shape = 's32[1]{0}', space=sflag, size = 0x4, scoped, tag = 'scoped memory for _lambda_.1']
    #allocation11 [shape = 'u8[16384]{0}', space=vmem, size = 0x4000, scoped, tag = 'input window, operand 5, single buffered']
    #allocation12 [shape = 'u8[16384]{0}', space=vmem, size = 0x4000, scoped, tag = 'input window, operand 6, single buffered']
    #allocation13 [shape = 's32[1]{0}', space=sflag, size = 0x4, scoped, tag = 'scoped memory for _lambda_.1']
    #allocation14 [shape = 'u8[16384]{0}', space=vmem, size = 0x4000, scoped, tag = 'input window, operand 7, single buffered']
    #allocation15 [shape = 'u8[16384]{0}', space=vmem, size = 0x4000, scoped, tag = 'input window, operand 8, single buffered']
    #allocation16 [shape = 's32[1]{0}', space=sflag, size = 0x4, scoped, tag = 'scoped memory for _lambda_.1']
    #allocation17 [shape = 'u8[16384]{0}', space=vmem, size = 0x4000, scoped, tag = 'input window, operand 9, single buffered']
    #allocation18 [shape = 'u8[16384]{0}', space=vmem, size = 0x4000, scoped, tag = 'input window, operand 10, single buffered']
    #allocation19 [shape = 's32[1]{0}', space=sflag, size = 0x4, scoped, tag = 'scoped memory for _lambda_.1']
    #allocation20 [shape = 'u8[16384]{0}', space=vmem, size = 0x4000, scoped, tag = 'input window, operand 11, single buffered']
    #allocation21 [shape = 'u8[16384]{0}', space=vmem, size = 0x4000, scoped, tag = 'input window, operand 13, single buffered']
    #allocation22 [shape = 's32[1]{0}', space=sflag, size = 0x4, scoped, tag = 'scoped memory for _lambda_.1']
    #allocation23 [shape = 'u8[65536]{0}', space=vmem, size = 0x10000, scoped, tag = 'output window, operand 0']
    %21 = vsyncpa [#allocation4], 0
    %22 = vsyncpa [#allocation7], 0
    %23 = vsyncpa [#allocation10], 0
    %24 = vsyncpa [#allocation13], 0
    %25 = vsyncpa [#allocation16], 0
    %26 = vsyncpa [#allocation19], 0
    %27 = vsyncpa [#allocation22], 0
    %28 = vsyncpa [#allocation5], 0
    %s29 = scalar_lea.sflag [#allocation5], 1
    %30 = vsyncpa %s29, 0
    loop: start=0, step=1, limit=4
    $region2: #{_lambda_.1} parent=1 // loop_pre_header
      _
    $region3: #{_lambda_.1} parent=1 // loop_header
      %s32 = sphi 0, %s36
      %p33 = scmp.ge.s32.totalorder %s32, 4
      %s42 = sphi 0, %s44
      %s45 = sphi 0, %s42
      %s46 = sphi 0, %s45
      %s62 = sphi 0, %s46
      %s66 = sphi 0, %s66
      %s68 = sphi 0, %s66
      %s69 = sphi 0, %s68
      %s83 = sphi 0, %s69
      %s87 = sphi 0, %s87
      %s89 = sphi 0, %s87
      %s90 = sphi 0, %s89
      %s104 = sphi 0, %s90
      %s108 = sphi 0, %s108
      %s110 = sphi 0, %s108
      %s111 = sphi 0, %s110
      %s125 = sphi 0, %s111
      %s129 = sphi 0, %s129
      %s131 = sphi 0, %s129
      %s132 = sphi 0, %s131
      %s146 = sphi 0, %s132
      %s150 = sphi 0, %s150
      %s152 = sphi 0, %s150
      %s153 = sphi 0, %s152
      %s167 = sphi 0, %s153
      %s171 = sphi 0, %s171
      %s173 = sphi 0, %s171
      %s174 = sphi 0, %s173
      %s188 = sphi 0, %s174
      %s192 = sphi 0, %s192
      %s194 = sphi 0, %s192
      %s195 = sphi 0, %s194
      %s209 = sphi 0, %s195
      %s213 = sphi 0, %s213
      %s215 = sphi 0, %s213
      %s216 = sphi 0, %s215
      %s230 = sphi 0, %s216
      %s234 = sphi 0, %s234
      %s236 = sphi 0, %s234
      %s237 = sphi 0, %s236
      %s251 = sphi 0, %s237
      %s255 = sphi 0, %s255
      %s257 = sphi 0, %s255
      %s258 = sphi 0, %s257
      %s272 = sphi 0, %s258
      %s276 = sphi 0, %s276
      %s278 = sphi 0, %s276
      %s279 = sphi 0, %s278
      %s293 = sphi 0, %s279
      %s297 = sphi 0, %s297
      %s299 = sphi 0, %s297
      %s300 = sphi 0, %s299
      %s314 = sphi 0, %s300
      %s318 = sphi 0, %s318
      %s320 = sphi 0, %s318
      %s321 = sphi 0, %s320
      %s335 = sphi 0, %s321
      %s339 = sphi 0, %s339
      %s341 = sphi 0, %s339
      %s342 = sphi 0, %s341
      %s356 = sphi 0, %s342
      %s360 = sphi 0, %s360
      %s362 = sphi 0, %s360
      %s363 = sphi 0, %s362
      %s377 = sphi 0, %s363
      %s383 = sphi 0, %s385
      %s386 = sphi 0, %s383
      %s387 = sphi 0, %s386
      %s403 = sphi 0, %s387
    $region4: #{_lambda_.1} parent=1 // loop_header_branch
      %35 = sbr.rel (%p33) target = $region8
    $region5: #{_lambda_.1} parent=1 // loop_body
      %s37 = ssub.s32 %s32, 1
      %s38 = ssub.s32 %s32, 2
      %s39 = sadd.s32 %s32, 1
      %s40 = ssub.s32 %s32, %s39
      %p41 = scmp.eq.s32.totalorder %s40, 0
      %s43 = sadd.s32 %s42, 1
      %s44 = scalar_select %p41, %s42, %s43
      %p47 = pneg %p41
      %p48 = scmp.eq.s32.totalorder %s32, 1
      %p49 = por %p47, %p48
      %p50 = scmp.ne.s32.totalorder %s42, %s45
      %p51 = scmp.eq.s32.totalorder %s32, 0
      %p52 = por %p50, %p51
      %p53 = scmp.ne.s32.totalorder %s42, %s45
      %p54 = scmp.eq.s32.totalorder %s37, 1
      %p55 = por %p53, %p54
      %p56 = scmp.ne.s32.totalorder %s45, %s46
      %p57 = scmp.eq.s32.totalorder %s37, 0
      %p58 = por %p56, %p57
      %p59 = scmp.ne.s32.totalorder %s45, %s46
      %p60 = scmp.eq.s32.totalorder %s38, 1
      %p61 = por %p59, %p60
      %p63 = scmp.ne.s32.totalorder %s46, %s62
      %p64 = scmp.eq.s32.totalorder %s38, 0
      %p65 = por %p63, %p64
      %s67 = sadd.s32 %s66, 1
      %p70 = scmp.eq.s32.totalorder %s32, 1
      %p71 = scmp.ne.s32.totalorder %s66, %s68
      %p72 = scmp.eq.s32.totalorder %s32, 0
      %p73 = por %p71, %p72
      %p74 = scmp.ne.s32.totalorder %s66, %s68
      %p75 = scmp.eq.s32.totalorder %s37, 1
      %p76 = por %p74, %p75
      %p77 = scmp.ne.s32.totalorder %s68, %s69
      %p78 = scmp.eq.s32.totalorder %s37, 0
      %p79 = por %p77, %p78
      %p80 = scmp.ne.s32.totalorder %s68, %s69
      %p81 = scmp.eq.s32.totalorder %s38, 1
      %p82 = por %p80, %p81
      %p84 = scmp.ne.s32.totalorder %s69, %s83
      %p85 = scmp.eq.s32.totalorder %s38, 0
      %p86 = por %p84, %p85
      %s88 = sadd.s32 %s87, 1
      %p91 = scmp.eq.s32.totalorder %s32, 1
      %p92 = scmp.ne.s32.totalorder %s87, %s89
      %p93 = scmp.eq.s32.totalorder %s32, 0
      %p94 = por %p92, %p93
      %p95 = scmp.ne.s32.totalorder %s87, %s89
      %p96 = scmp.eq.s32.totalorder %s37, 1
      %p97 = por %p95, %p96
      %p98 = scmp.ne.s32.totalorder %s89, %s90
      %p99 = scmp.eq.s32.totalorder %s37, 0
      %p100 = por %p98, %p99
      %p101 = scmp.ne.s32.totalorder %s89, %s90
      %p102 = scmp.eq.s32.totalorder %s38, 1
      %p103 = por %p101, %p102
      %p105 = scmp.ne.s32.totalorder %s90, %s104
      %p106 = scmp.eq.s32.totalorder %s38, 0
      %p107 = por %p105, %p106
      %s109 = sadd.s32 %s108, 1
      %p112 = scmp.eq.s32.totalorder %s32, 1
      %p113 = scmp.ne.s32.totalorder %s108, %s110
      %p114 = scmp.eq.s32.totalorder %s32, 0
      %p115 = por %p113, %p114
      %p116 = scmp.ne.s32.totalorder %s108, %s110
      %p117 = scmp.eq.s32.totalorder %s37, 1
      %p118 = por %p116, %p117
      %p119 = scmp.ne.s32.totalorder %s110, %s111
      %p120 = scmp.eq.s32.totalorder %s37, 0
      %p121 = por %p119, %p120
      %p122 = scmp.ne.s32.totalorder %s110, %s111
      %p123 = scmp.eq.s32.totalorder %s38, 1
      %p124 = por %p122, %p123
      %p126 = scmp.ne.s32.totalorder %s111, %s125
      %p127 = scmp.eq.s32.totalorder %s38, 0
      %p128 = por %p126, %p127
      %s130 = sadd.s32 %s129, 1
      %p133 = scmp.eq.s32.totalorder %s32, 1
      %p134 = scmp.ne.s32.totalorder %s129, %s131
      %p135 = scmp.eq.s32.totalorder %s32, 0
      %p136 = por %p134, %p135
      %p137 = scmp.ne.s32.totalorder %s129, %s131
      %p138 = scmp.eq.s32.totalorder %s37, 1
      %p139 = por %p137, %p138
      %p140 = scmp.ne.s32.totalorder %s131, %s132
      %p141 = scmp.eq.s32.totalorder %s37, 0
      %p142 = por %p140, %p141
      %p143 = scmp.ne.s32.totalorder %s131, %s132
      %p144 = scmp.eq.s32.totalorder %s38, 1
      %p145 = por %p143, %p144
      %p147 = scmp.ne.s32.totalorder %s132, %s146
      %p148 = scmp.eq.s32.totalorder %s38, 0
      %p149 = por %p147, %p148
      %s151 = sadd.s32 %s150, 1
      %p154 = scmp.eq.s32.totalorder %s32, 1
      %p155 = scmp.ne.s32.totalorder %s150, %s152
      %p156 = scmp.eq.s32.totalorder %s32, 0
      %p157 = por %p155, %p156
      %p158 = scmp.ne.s32.totalorder %s150, %s152
      %p159 = scmp.eq.s32.totalorder %s37, 1
      %p160 = por %p158, %p159
      %p161 = scmp.ne.s32.totalorder %s152, %s153
      %p162 = scmp.eq.s32.totalorder %s37, 0
      %p163 = por %p161, %p162
      %p164 = scmp.ne.s32.totalorder %s152, %s153
      %p165 = scmp.eq.s32.totalorder %s38, 1
      %p166 = por %p164, %p165
      %p168 = scmp.ne.s32.totalorder %s153, %s167
      %p169 = scmp.eq.s32.totalorder %s38, 0
      %p170 = por %p168, %p169
      %s172 = sadd.s32 %s171, 1
      %p175 = scmp.eq.s32.totalorder %s32, 1
      %p176 = scmp.ne.s32.totalorder %s171, %s173
      %p177 = scmp.eq.s32.totalorder %s32, 0
      %p178 = por %p176, %p177
      %p179 = scmp.ne.s32.totalorder %s171, %s173
      %p180 = scmp.eq.s32.totalorder %s37, 1
      %p181 = por %p179, %p180
      %p182 = scmp.ne.s32.totalorder %s173, %s174
      %p183 = scmp.eq.s32.totalorder %s37, 0
      %p184 = por %p182, %p183
      %p185 = scmp.ne.s32.totalorder %s173, %s174
      %p186 = scmp.eq.s32.totalorder %s38, 1
      %p187 = por %p185, %p186
      %p189 = scmp.ne.s32.totalorder %s174, %s188
      %p190 = scmp.eq.s32.totalorder %s38, 0
      %p191 = por %p189, %p190
      %s193 = sadd.s32 %s192, 1
      %p196 = scmp.eq.s32.totalorder %s32, 1
      %p197 = scmp.ne.s32.totalorder %s192, %s194
      %p198 = scmp.eq.s32.totalorder %s32, 0
      %p199 = por %p197, %p198
      %p200 = scmp.ne.s32.totalorder %s192, %s194
      %p201 = scmp.eq.s32.totalorder %s37, 1
      %p202 = por %p200, %p201
      %p203 = scmp.ne.s32.totalorder %s194, %s195
      %p204 = scmp.eq.s32.totalorder %s37, 0
      %p205 = por %p203, %p204
      %p206 = scmp.ne.s32.totalorder %s194, %s195
      %p207 = scmp.eq.s32.totalorder %s38, 1
      %p208 = por %p206, %p207
      %p210 = scmp.ne.s32.totalorder %s195, %s209
      %p211 = scmp.eq.s32.totalorder %s38, 0
      %p212 = por %p210, %p211
      %s214 = sadd.s32 %s213, 1
      %p217 = scmp.eq.s32.totalorder %s32, 1
      %p218 = scmp.ne.s32.totalorder %s213, %s215
      %p219 = scmp.eq.s32.totalorder %s32, 0
      %p220 = por %p218, %p219
      %p221 = scmp.ne.s32.totalorder %s213, %s215
      %p222 = scmp.eq.s32.totalorder %s37, 1
      %p223 = por %p221, %p222
      %p224 = scmp.ne.s32.totalorder %s215, %s216
      %p225 = scmp.eq.s32.totalorder %s37, 0
      %p226 = por %p224, %p225
      %p227 = scmp.ne.s32.totalorder %s215, %s216
      %p228 = scmp.eq.s32.totalorder %s38, 1
      %p229 = por %p227, %p228
      %p231 = scmp.ne.s32.totalorder %s216, %s230
      %p232 = scmp.eq.s32.totalorder %s38, 0
      %p233 = por %p231, %p232
      %s235 = sadd.s32 %s234, 1
      %p238 = scmp.eq.s32.totalorder %s32, 1
      %p239 = scmp.ne.s32.totalorder %s234, %s236
      %p240 = scmp.eq.s32.totalorder %s32, 0
      %p241 = por %p239, %p240
      %p242 = scmp.ne.s32.totalorder %s234, %s236
      %p243 = scmp.eq.s32.totalorder %s37, 1
      %p244 = por %p242, %p243
      %p245 = scmp.ne.s32.totalorder %s236, %s237
      %p246 = scmp.eq.s32.totalorder %s37, 0
      %p247 = por %p245, %p246
      %p248 = scmp.ne.s32.totalorder %s236, %s237
      %p249 = scmp.eq.s32.totalorder %s38, 1
      %p250 = por %p248, %p249
      %p252 = scmp.ne.s32.totalorder %s237, %s251
      %p253 = scmp.eq.s32.totalorder %s38, 0
      %p254 = por %p252, %p253
      %s256 = sadd.s32 %s255, 1
      %p259 = scmp.eq.s32.totalorder %s32, 1
      %p260 = scmp.ne.s32.totalorder %s255, %s257
      %p261 = scmp.eq.s32.totalorder %s32, 0
      %p262 = por %p260, %p261
      %p263 = scmp.ne.s32.totalorder %s255, %s257
      %p264 = scmp.eq.s32.totalorder %s37, 1
      %p265 = por %p263, %p264
      %p266 = scmp.ne.s32.totalorder %s257, %s258
      %p267 = scmp.eq.s32.totalorder %s37, 0
      %p268 = por %p266, %p267
      %p269 = scmp.ne.s32.totalorder %s257, %s258
      %p270 = scmp.eq.s32.totalorder %s38, 1
      %p271 = por %p269, %p270
      %p273 = scmp.ne.s32.totalorder %s258, %s272
      %p274 = scmp.eq.s32.totalorder %s38, 0
      %p275 = por %p273, %p274
      %s277 = sadd.s32 %s276, 1
      %p280 = scmp.eq.s32.totalorder %s32, 1
      %p281 = scmp.ne.s32.totalorder %s276, %s278
      %p282 = scmp.eq.s32.totalorder %s32, 0
      %p283 = por %p281, %p282
      %p284 = scmp.ne.s32.totalorder %s276, %s278
      %p285 = scmp.eq.s32.totalorder %s37, 1
      %p286 = por %p284, %p285
      %p287 = scmp.ne.s32.totalorder %s278, %s279
      %p288 = scmp.eq.s32.totalorder %s37, 0
      %p289 = por %p287, %p288
      %p290 = scmp.ne.s32.totalorder %s278, %s279
      %p291 = scmp.eq.s32.totalorder %s38, 1
      %p292 = por %p290, %p291
      %p294 = scmp.ne.s32.totalorder %s279, %s293
      %p295 = scmp.eq.s32.totalorder %s38, 0
      %p296 = por %p294, %p295
      %s298 = sadd.s32 %s297, 1
      %p301 = scmp.eq.s32.totalorder %s32, 1
      %p302 = scmp.ne.s32.totalorder %s297, %s299
      %p303 = scmp.eq.s32.totalorder %s32, 0
      %p304 = por %p302, %p303
      %p305 = scmp.ne.s32.totalorder %s297, %s299
      %p306 = scmp.eq.s32.totalorder %s37, 1
      %p307 = por %p305, %p306
      %p308 = scmp.ne.s32.totalorder %s299, %s300
      %p309 = scmp.eq.s32.totalorder %s37, 0
      %p310 = por %p308, %p309
      %p311 = scmp.ne.s32.totalorder %s299, %s300
      %p312 = scmp.eq.s32.totalorder %s38, 1
      %p313 = por %p311, %p312
      %p315 = scmp.ne.s32.totalorder %s300, %s314
      %p316 = scmp.eq.s32.totalorder %s38, 0
      %p317 = por %p315, %p316
      %s319 = sadd.s32 %s318, 1
      %p322 = scmp.eq.s32.totalorder %s32, 1
      %p323 = scmp.ne.s32.totalorder %s318, %s320
      %p324 = scmp.eq.s32.totalorder %s32, 0
      %p325 = por %p323, %p324
      %p326 = scmp.ne.s32.totalorder %s318, %s320
      %p327 = scmp.eq.s32.totalorder %s37, 1
      %p328 = por %p326, %p327
      %p329 = scmp.ne.s32.totalorder %s320, %s321
      %p330 = scmp.eq.s32.totalorder %s37, 0
      %p331 = por %p329, %p330
      %p332 = scmp.ne.s32.totalorder %s320, %s321
      %p333 = scmp.eq.s32.totalorder %s38, 1
      %p334 = por %p332, %p333
      %p336 = scmp.ne.s32.totalorder %s321, %s335
      %p337 = scmp.eq.s32.totalorder %s38, 0
      %p338 = por %p336, %p337
      %s340 = sadd.s32 %s339, 1
      %p343 = scmp.eq.s32.totalorder %s32, 1
      %p344 = scmp.ne.s32.totalorder %s339, %s341
      %p345 = scmp.eq.s32.totalorder %s32, 0
      %p346 = por %p344, %p345
      %p347 = scmp.ne.s32.totalorder %s339, %s341
      %p348 = scmp.eq.s32.totalorder %s37, 1
      %p349 = por %p347, %p348
      %p350 = scmp.ne.s32.totalorder %s341, %s342
      %p351 = scmp.eq.s32.totalorder %s37, 0
      %p352 = por %p350, %p351
      %p353 = scmp.ne.s32.totalorder %s341, %s342
      %p354 = scmp.eq.s32.totalorder %s38, 1
      %p355 = por %p353, %p354
      %p357 = scmp.ne.s32.totalorder %s342, %s356
      %p358 = scmp.eq.s32.totalorder %s38, 0
      %p359 = por %p357, %p358
      %s361 = sadd.s32 %s360, 1
      %p364 = scmp.eq.s32.totalorder %s32, 1
      %p365 = scmp.ne.s32.totalorder %s360, %s362
      %p366 = scmp.eq.s32.totalorder %s32, 0
      %p367 = por %p365, %p366
      %p368 = scmp.ne.s32.totalorder %s360, %s362
      %p369 = scmp.eq.s32.totalorder %s37, 1
      %p370 = por %p368, %p369
      %p371 = scmp.ne.s32.totalorder %s362, %s363
      %p372 = scmp.eq.s32.totalorder %s37, 0
      %p373 = por %p371, %p372
      %p374 = scmp.ne.s32.totalorder %s362, %s363
      %p375 = scmp.eq.s32.totalorder %s38, 1
      %p376 = por %p374, %p375
      %p378 = scmp.ne.s32.totalorder %s363, %s377
      %p379 = scmp.eq.s32.totalorder %s38, 0
      %p380 = por %p378, %p379
      %s381 = ssub.s32 %s32, %s39
      %p382 = scmp.eq.s32.totalorder %s381, 0
      %s384 = sadd.s32 %s383, 1
      %s385 = scalar_select %p382, %s383, %s384
      %p388 = pneg %p382
      %p389 = scmp.eq.s32.totalorder %s32, 1
      %p390 = por %p388, %p389
      %p391 = scmp.ne.s32.totalorder %s383, %s386
      %p392 = scmp.eq.s32.totalorder %s32, 0
      %p393 = por %p391, %p392
      %p394 = scmp.ne.s32.totalorder %s383, %s386
      %p395 = scmp.eq.s32.totalorder %s37, 1
      %p396 = por %p394, %p395
      %p397 = scmp.ne.s32.totalorder %s386, %s387
      %p398 = scmp.eq.s32.totalorder %s37, 0
      %p399 = por %p397, %p398
      %p400 = scmp.ne.s32.totalorder %s386, %s387
      %p401 = scmp.eq.s32.totalorder %s38, 1
      %p402 = por %p400, %p401
      %p404 = scmp.ne.s32.totalorder %s387, %s403
      %p405 = scmp.eq.s32.totalorder %s38, 0
      %p406 = por %p404, %p405
      %p407 = scmp.le.s32.totalorder 1, %s32
      %p408 = scmp.lt.s32.totalorder %s32, 3
      %p409 = pnand %p407, %p408
      %p410 = pneg %p409
      // Predicated region
      $region9: #{_lambda_.1} parent=5 // pred_check
        _
      $region10: #{_lambda_.1} parent=5 // pred_check_branch
        %412 = sbr.rel (%p409) target = $region12
      $region11: #{_lambda_.1} parent=5 // pred_region
        %s413 = ssub.s32 %s32, 1
        // Predicated region
        $region13: #{_lambda_.1} parent=11 // pred_check
          %p414 = pneg %p79
        $region14: #{_lambda_.1} parent=11 // pred_check_branch
          %416 = sbr.rel (%p414) target = $region16
        $region15: #{_lambda_.1} parent=11 // pred_region
          %s418 = ssub.s32 512, 512
          %419 = vsyncadd [#allocation4], %s418
          %s420 = sshll.u32 [#allocation3], 4
          %s421 = int_to_ptr.vmem [resolvable:$true] %s420
          %426 = dma.hbm_to_vmem [thread:$0]  %s1, 512, %s421, [#allocation4], 128, 128, 8
        $region16: #{_lambda_.1} parent=11 // pred_fallthru
          _
        // Predicated region
        $region17: #{_lambda_.1} parent=11 // pred_check
          %p427 = pneg %p100
        $region18: #{_lambda_.1} parent=11 // pred_check_branch
          %429 = sbr.rel (%p427) target = $region20
        $region19: #{_lambda_.1} parent=11 // pred_region
          %s431 = ssub.s32 512, 512
          %432 = vsyncadd [#allocation7], %s431
          %s433 = sshll.u32 [#allocation6], 4
          %s434 = int_to_ptr.vmem [resolvable:$true] %s433
          %439 = dma.hbm_to_vmem [thread:$0]  %s2, 512, %s434, [#allocation7], 128, 128, 8
        $region20: #{_lambda_.1} parent=11 // pred_fallthru
          _
        // Predicated region
        $region21: #{_lambda_.1} parent=11 // pred_check
          %p440 = pneg %p121
        $region22: #{_lambda_.1} parent=11 // pred_check_branch
          %442 = sbr.rel (%p440) target = $region24
        $region23: #{_lambda_.1} parent=11 // pred_region
          %s444 = ssub.s32 512, 512
          %445 = vsyncadd [#allocation7], %s444
          %s446 = sshll.u32 [#allocation8], 4
          %s447 = int_to_ptr.vmem [resolvable:$true] %s446
          %452 = dma.hbm_to_vmem [thread:$0]  %s3, 512, %s447, [#allocation7], 128, 128, 8
        $region24: #{_lambda_.1} parent=11 // pred_fallthru
          _
        // Predicated region
        $region25: #{_lambda_.1} parent=11 // pred_check
          %p453 = pneg %p142
        $region26: #{_lambda_.1} parent=11 // pred_check_branch
          %455 = sbr.rel (%p453) target = $region28
        $region27: #{_lambda_.1} parent=11 // pred_region
          %s457 = ssub.s32 512, 512
          %458 = vsyncadd [#allocation10], %s457
          %s459 = sshll.u32 [#allocation9], 4
          %s460 = int_to_ptr.vmem [resolvable:$true] %s459
          %465 = dma.hbm_to_vmem [thread:$0]  %s4, 512, %s460, [#allocation10], 128, 128, 8
        $region28: #{_lambda_.1} parent=11 // pred_fallthru
          _
        // Predicated region
        $region29: #{_lambda_.1} parent=11 // pred_check
          %p466 = pneg %p163
        $region30: #{_lambda_.1} parent=11 // pred_check_branch
          %468 = sbr.rel (%p466) target = $region32
        $region31: #{_lambda_.1} parent=11 // pred_region
          %s470 = ssub.s32 512, 512
          %471 = vsyncadd [#allocation10], %s470
          %s472 = sshll.u32 [#allocation11], 4
          %s473 = int_to_ptr.vmem [resolvable:$true] %s472
          %478 = dma.hbm_to_vmem [thread:$0]  %s5, 512, %s473, [#allocation10], 128, 128, 8
        $region32: #{_lambda_.1} parent=11 // pred_fallthru
          _
        // Predicated region
        $region33: #{_lambda_.1} parent=11 // pred_check
          %p479 = pneg %p184
        $region34: #{_lambda_.1} parent=11 // pred_check_branch
          %481 = sbr.rel (%p479) target = $region36
        $region35: #{_lambda_.1} parent=11 // pred_region
          %s483 = ssub.s32 512, 512
          %484 = vsyncadd [#allocation13], %s483
          %s485 = sshll.u32 [#allocation12], 4
          %s486 = int_to_ptr.vmem [resolvable:$true] %s485
          %491 = dma.hbm_to_vmem [thread:$0]  %s6, 512, %s486, [#allocation13], 128, 128, 8
        $region36: #{_lambda_.1} parent=11 // pred_fallthru
          _
        // Predicated region
        $region37: #{_lambda_.1} parent=11 // pred_check
          %p492 = pneg %p205
        $region38: #{_lambda_.1} parent=11 // pred_check_branch
          %494 = sbr.rel (%p492) target = $region40
        $region39: #{_lambda_.1} parent=11 // pred_region
          %s496 = ssub.s32 512, 512
          %497 = vsyncadd [#allocation13], %s496
          %s498 = sshll.u32 [#allocation14], 4
          %s499 = int_to_ptr.vmem [resolvable:$true] %s498
          %504 = dma.hbm_to_vmem [thread:$0]  %s7, 512, %s499, [#allocation13], 128, 128, 8
        $region40: #{_lambda_.1} parent=11 // pred_fallthru
          _
        // Predicated region
        $region41: #{_lambda_.1} parent=11 // pred_check
          %p505 = pneg %p226
        $region42: #{_lambda_.1} parent=11 // pred_check_branch
          %507 = sbr.rel (%p505) target = $region44
        $region43: #{_lambda_.1} parent=11 // pred_region
          %s509 = ssub.s32 512, 512
          %510 = vsyncadd [#allocation16], %s509
          %s511 = sshll.u32 [#allocation15], 4
          %s512 = int_to_ptr.vmem [resolvable:$true] %s511
          %517 = dma.hbm_to_vmem [thread:$0]  %s8, 512, %s512, [#allocation16], 128, 128, 8
        $region44: #{_lambda_.1} parent=11 // pred_fallthru
          _
        // Predicated region
        $region45: #{_lambda_.1} parent=11 // pred_check
          %p518 = pneg %p247
        $region46: #{_lambda_.1} parent=11 // pred_check_branch
          %520 = sbr.rel (%p518) target = $region48
        $region47: #{_lambda_.1} parent=11 // pred_region
          %s522 = ssub.s32 512, 512
          %523 = vsyncadd [#allocation16], %s522
          %s524 = sshll.u32 [#allocation17], 4
          %s525 = int_to_ptr.vmem [resolvable:$true] %s524
          %530 = dma.hbm_to_vmem [thread:$0]  %s9, 512, %s525, [#allocation16], 128, 128, 8
        $region48: #{_lambda_.1} parent=11 // pred_fallthru
          _
        // Predicated region
        $region49: #{_lambda_.1} parent=11 // pred_check
          %p531 = pneg %p268
        $region50: #{_lambda_.1} parent=11 // pred_check_branch
          %533 = sbr.rel (%p531) target = $region52
        $region51: #{_lambda_.1} parent=11 // pred_region
          %s535 = ssub.s32 512, 512
          %536 = vsyncadd [#allocation19], %s535
          %s537 = sshll.u32 [#allocation18], 4
          %s538 = int_to_ptr.vmem [resolvable:$true] %s537
          %543 = dma.hbm_to_vmem [thread:$0]  %s10, 512, %s538, [#allocation19], 128, 128, 8
        $region52: #{_lambda_.1} parent=11 // pred_fallthru
          _
        // Predicated region
        $region53: #{_lambda_.1} parent=11 // pred_check
          %p544 = pneg %p289
        $region54: #{_lambda_.1} parent=11 // pred_check_branch
          %546 = sbr.rel (%p544) target = $region56
        $region55: #{_lambda_.1} parent=11 // pred_region
          %s548 = ssub.s32 512, 512
          %549 = vsyncadd [#allocation19], %s548
          %s550 = sshll.u32 [#allocation20], 4
          %s551 = int_to_ptr.vmem [resolvable:$true] %s550
          %556 = dma.hbm_to_vmem [thread:$0]  %s11, 512, %s551, [#allocation19], 128, 128, 8
        $region56: #{_lambda_.1} parent=11 // pred_fallthru
          _
        // Predicated region
        $region57: #{_lambda_.1} parent=11 // pred_check
          %p557 = pneg %p310
        $region58: #{_lambda_.1} parent=11 // pred_check_branch
          %559 = sbr.rel (%p557) target = $region60
        $region59: #{_lambda_.1} parent=11 // pred_region
          _
        $region60: #{_lambda_.1} parent=11 // pred_fallthru
          _
        // Predicated region
        $region61: #{_lambda_.1} parent=11 // pred_check
          %p560 = pneg %p331
        $region62: #{_lambda_.1} parent=11 // pred_check_branch
          %562 = sbr.rel (%p560) target = $region64
        $region63: #{_lambda_.1} parent=11 // pred_region
          %s564 = ssub.s32 512, 512
          %565 = vsyncadd [#allocation22], %s564
          %s566 = sshll.u32 [#allocation21], 4
          %s567 = int_to_ptr.vmem [resolvable:$true] %s566
          %572 = dma.hbm_to_vmem [thread:$0]  %s13, 512, %s567, [#allocation22], 128, 128, 8
        $region64: #{_lambda_.1} parent=11 // pred_fallthru
          _
        // Predicated region
        $region65: #{_lambda_.1} parent=11 // pred_check
          %p573 = pneg %p352
        $region66: #{_lambda_.1} parent=11 // pred_check_branch
          %575 = sbr.rel (%p573) target = $region68
        $region67: #{_lambda_.1} parent=11 // pred_region
          _
        $region68: #{_lambda_.1} parent=11 // pred_fallthru
          _
        // Predicated region
        $region69: #{_lambda_.1} parent=11 // pred_check
          %p576 = pneg %p373
        $region70: #{_lambda_.1} parent=11 // pred_check_branch
          %578 = sbr.rel (%p576) target = $region72
        $region71: #{_lambda_.1} parent=11 // pred_region
          _
        $region72: #{_lambda_.1} parent=11 // pred_fallthru
          _
      $region12: #{_lambda_.1} parent=5 // pred_fallthru
        _
      %p579 = scmp.lt.s32.totalorder %s32, 2
      // Predicated region
      $region73: #{_lambda_.1} parent=5 // pred_check
        %p580 = pneg %p579
      $region74: #{_lambda_.1} parent=5 // pred_check_branch
        %582 = sbr.rel (%p580) target = $region76
      $region75: #{_lambda_.1} parent=5 // pred_region
        // Predicated region
        $region77: #{_lambda_.1} parent=75 // pred_check
          %p583 = pneg %p52
        $region78: #{_lambda_.1} parent=75 // pred_check_branch
          %585 = sbr.rel (%p583) target = $region80
        $region79: #{_lambda_.1} parent=75 // pred_region
          %p586 = scmp.lt.s32.totalorder %s32, 1
          %s587 = scalar_select %p586, %s32, 1
          %s588 = smul.addr %s587, 8
          %s589 = smul.addr %s588, 4
          %s590 = scalar_lea.vmem %s0, %s589
        $region80: #{_lambda_.1} parent=75 // pred_fallthru
          _
      $region76: #{_lambda_.1} parent=5 // pred_fallthru
        _
      %p591 = scmp.le.s32.totalorder 1, %s32
      %p592 = scmp.lt.s32.totalorder %s32, 3
      %p593 = pnand %p591, %p592
      %p594 = pneg %p593
      // Predicated region
      $region81: #{_lambda_.1} parent=5 // pred_check
        _
      $region82: #{_lambda_.1} parent=5 // pred_check_branch
        %596 = sbr.rel (%p593) target = $region84
      $region83: #{_lambda_.1} parent=5 // pred_region
        %s597 = ssub.s32 %s32, 1
        // Predicated region
        $region85: #{_lambda_.1} parent=83 // pred_check
          %p598 = pneg %p79
        $region86: #{_lambda_.1} parent=83 // pred_check_branch
          %600 = sbr.rel (%p598) target = $region88
        $region87: #{_lambda_.1} parent=83 // pred_region
          %601 = dma.done [#allocation4], 512
        $region88: #{_lambda_.1} parent=83 // pred_fallthru
          _
        // Predicated region
        $region89: #{_lambda_.1} parent=83 // pred_check
          %p602 = pneg %p100
        $region90: #{_lambda_.1} parent=83 // pred_check_branch
          %604 = sbr.rel (%p602) target = $region92
        $region91: #{_lambda_.1} parent=83 // pred_region
          %605 = dma.done [#allocation7], 512
        $region92: #{_lambda_.1} parent=83 // pred_fallthru
          _
        // Predicated region
        $region93: #{_lambda_.1} parent=83 // pred_check
          %p606 = pneg %p121
        $region94: #{_lambda_.1} parent=83 // pred_check_branch
          %608 = sbr.rel (%p606) target = $region96
        $region95: #{_lambda_.1} parent=83 // pred_region
          %609 = dma.done [#allocation7], 512
        $region96: #{_lambda_.1} parent=83 // pred_fallthru
          _
        // Predicated region
        $region97: #{_lambda_.1} parent=83 // pred_check
          %p610 = pneg %p142
        $region98: #{_lambda_.1} parent=83 // pred_check_branch
          %612 = sbr.rel (%p610) target = $region100
        $region99: #{_lambda_.1} parent=83 // pred_region
          %613 = dma.done [#allocation10], 512
        $region100: #{_lambda_.1} parent=83 // pred_fallthru
          _
        // Predicated region
        $region101: #{_lambda_.1} parent=83 // pred_check
          %p614 = pneg %p163
        $region102: #{_lambda_.1} parent=83 // pred_check_branch
          %616 = sbr.rel (%p614) target = $region104
        $region103: #{_lambda_.1} parent=83 // pred_region
          %617 = dma.done [#allocation10], 512
        $region104: #{_lambda_.1} parent=83 // pred_fallthru
          _
        // Predicated region
        $region105: #{_lambda_.1} parent=83 // pred_check
          %p618 = pneg %p184
        $region106: #{_lambda_.1} parent=83 // pred_check_branch
          %620 = sbr.rel (%p618) target = $region108
        $region107: #{_lambda_.1} parent=83 // pred_region
          %621 = dma.done [#allocation13], 512
        $region108: #{_lambda_.1} parent=83 // pred_fallthru
          _
        // Predicated region
        $region109: #{_lambda_.1} parent=83 // pred_check
          %p622 = pneg %p205
        $region110: #{_lambda_.1} parent=83 // pred_check_branch
          %624 = sbr.rel (%p622) target = $region112
        $region111: #{_lambda_.1} parent=83 // pred_region
          %625 = dma.done [#allocation13], 512
        $region112: #{_lambda_.1} parent=83 // pred_fallthru
          _
        // Predicated region
        $region113: #{_lambda_.1} parent=83 // pred_check
          %p626 = pneg %p226
        $region114: #{_lambda_.1} parent=83 // pred_check_branch
          %628 = sbr.rel (%p626) target = $region116
        $region115: #{_lambda_.1} parent=83 // pred_region
          %629 = dma.done [#allocation16], 512
        $region116: #{_lambda_.1} parent=83 // pred_fallthru
          _
        // Predicated region
        $region117: #{_lambda_.1} parent=83 // pred_check
          %p630 = pneg %p247
        $region118: #{_lambda_.1} parent=83 // pred_check_branch
          %632 = sbr.rel (%p630) target = $region120
        $region119: #{_lambda_.1} parent=83 // pred_region
          %633 = dma.done [#allocation16], 512
        $region120: #{_lambda_.1} parent=83 // pred_fallthru
          _
        // Predicated region
        $region121: #{_lambda_.1} parent=83 // pred_check
          %p634 = pneg %p268
        $region122: #{_lambda_.1} parent=83 // pred_check_branch
          %636 = sbr.rel (%p634) target = $region124
        $region123: #{_lambda_.1} parent=83 // pred_region
          %637 = dma.done [#allocation19], 512
        $region124: #{_lambda_.1} parent=83 // pred_fallthru
          _
        // Predicated region
        $region125: #{_lambda_.1} parent=83 // pred_check
          %p638 = pneg %p289
        $region126: #{_lambda_.1} parent=83 // pred_check_branch
          %640 = sbr.rel (%p638) target = $region128
        $region127: #{_lambda_.1} parent=83 // pred_region
          %641 = dma.done [#allocation19], 512
        $region128: #{_lambda_.1} parent=83 // pred_fallthru
          _
        // Predicated region
        $region129: #{_lambda_.1} parent=83 // pred_check
          %p642 = pneg %p331
        $region130: #{_lambda_.1} parent=83 // pred_check_branch
          %644 = sbr.rel (%p642) target = $region132
        $region131: #{_lambda_.1} parent=83 // pred_region
          %645 = dma.done [#allocation22], 512
        $region132: #{_lambda_.1} parent=83 // pred_fallthru
          _
        %p646 = scmp.lt.s32.totalorder %s37, 1
        %s647 = scalar_select %p646, %s37, 1
        %s648 = smul.addr %s647, 8
        %s649 = smul.addr %s648, 4
        %s650 = scalar_lea.vmem %s0, %s649
        %p651 = pneg %p58
        %p652 = pneg %p55
        %p653 = pneg %p79
        %p654 = pneg %p76
        %p655 = pneg %p100
        %p656 = pneg %p97
        %p657 = pneg %p121
        %p658 = pneg %p118
        %p659 = pneg %p142
        %p660 = pneg %p139
        %p661 = pneg %p163
        %p662 = pneg %p160
        %p663 = pneg %p184
        %p664 = pneg %p181
        %p665 = pneg %p205
        %p666 = pneg %p202
        %p667 = pneg %p226
        %p668 = pneg %p223
        %p669 = pneg %p247
        %p670 = pneg %p244
        %p671 = pneg %p268
        %p672 = pneg %p265
        %p673 = pneg %p289
        %p674 = pneg %p286
        %p675 = pneg %p310
        %p676 = pneg %p307
        %p677 = pneg %p331
        %p678 = pneg %p328
        %p679 = pneg %p352
        %p680 = pneg %p349
        %p681 = pneg %p373
        %p682 = pneg %p370
        %p683 = pneg %p399
        %p684 = pneg %p396
        %s685 = sand.u32 %s386, 1
        %s686 = scalar_lea.sflag [#allocation5], %s685
        %s687 = sand.u32 %s386, 1
        %s688 = smul.addr %s687, 64
        %s689 = scalar_lea.vmem [#allocation23], %s688
        %p690 = scmp.lt.s32.totalorder %s37, 1
        %s691 = scalar_select %p690, %s37, 1
        %s692 = smul.addr %s691, 8
        %s693 = smul.addr %s692, 4
        %s694 = scalar_lea.vmem %s0, %s693
        %696 = vst [vmem:[#allocation2] sm:$0xff] 0
        %697 = vst [vmem:[#allocation2 + $0x8] sm:$0xff] 0
        %698 = vst [vmem:[#allocation2 + $0x10] sm:$0xff] 0
        %699 = vst [vmem:[#allocation2 + $0x18] sm:$0xff] 0
        %700 = vst [vmem:[#allocation2 + $0x20] sm:$0xff] 0
        %701 = vst [vmem:[#allocation2 + $0x28] sm:$0xff] 0
        %702 = vst [vmem:[#allocation2 + $0x30] sm:$0xff] 0
        %703 = vst [vmem:[#allocation2 + $0x38] sm:$0xff] 0
        %704 = vst [vmem:[#allocation2 + $0x40] sm:$0xff] 0
        %705 = vst [vmem:[#allocation2 + $0x48] sm:$0xff] 0
        %706 = vst [vmem:[#allocation2 + $0x50] sm:$0xff] 0
        %707 = vst [vmem:[#allocation2 + $0x58] sm:$0xff] 0
        %708 = vst [vmem:[#allocation2 + $0x60] sm:$0xff] 0
        %709 = vst [vmem:[#allocation2 + $0x68] sm:$0xff] 0
        %710 = vst [vmem:[#allocation2 + $0x70] sm:$0xff] 0
        %711 = vst [vmem:[#allocation2 + $0x78] sm:$0xff] 0
        %712 = vst [vmem:[#allocation2 + $0x80] sm:$0xff] 0
        %713 = vst [vmem:[#allocation2 + $0x88] sm:$0xff] 0
        %714 = vst [vmem:[#allocation2 + $0x90] sm:$0xff] 0
        %715 = vst [vmem:[#allocation2 + $0x98] sm:$0xff] 0
        %v716 = vld [vmem:[%s694] sm:$0xff]
        %v717 = vld [vmem:[%s694 + $0x8] sm:$0xff]
        %v718 = vld [vmem:[%s694 + $0x10] sm:$0xff]
        %v719 = vld [vmem:[%s694 + $0x18] sm:$0xff]
        %724 = vrot.lane.b32.xlu0 %v716, 2
        %v725 = vpop.permute.xlu0 %724
        %726 = vrot.lane.b32.xlu0 %v717, 2
        %v727 = vpop.permute.xlu0 %726
        %728 = vrot.lane.b32.xlu0 %v718, 2
        %v729 = vpop.permute.xlu0 %728
        %730 = vrot.lane.b32.xlu0 %v719, 2
        %v731 = vpop.permute.xlu0 %730
        %v732 = vrot.slane %v725, 4
        %v733 = vrot.slane %v727, 4
        %v734 = vrot.slane %v729, 4
        %v735 = vrot.slane %v731, 4
        %vm736 = vcmask 15360
        %v737 = vsel %vm736, %v732, %v725
        %v738 = vsel %vm736, %v733, %v727
        %v739 = vsel %vm736, %v734, %v729
        %v740 = vsel %vm736, %v735, %v731
        %vm745 = vcmask 1043472
        %vm746 = vcmask 1047556
        %vm747 = vmor %vm746, %vm745
        %748 = vst.msk [vmem:[#allocation2] sm:$0xff] %vm747, %v737
        %749 = vst.msk [vmem:[#allocation2 + $0x8] sm:$0xff] %vm747, %v738
        %750 = vst.msk [vmem:[#allocation2 + $0x10] sm:$0xff] %vm747, %v739
        %751 = vst.msk [vmem:[#allocation2 + $0x18] sm:$0xff] %vm747, %v740
        %752 = vrot.lane.b32.xlu0 %v716, 1
        %v753 = vpop.permute.xlu0 %752
        %754 = vrot.lane.b32.xlu0 %v717, 1
        %v755 = vpop.permute.xlu0 %754
        %756 = vrot.lane.b32.xlu0 %v718, 1
        %v757 = vpop.permute.xlu0 %756
        %758 = vrot.lane.b32.xlu0 %v719, 1
        %v759 = vpop.permute.xlu0 %758
        %v760 = vrot.slane %v753, 4
        %v761 = vrot.slane %v755, 4
        %v762 = vrot.slane %v757, 4
        %v763 = vrot.slane %v759, 4
        %vm764 = vcmask 7168
        %v765 = vsel %vm764, %v760, %v753
        %v766 = vsel %vm764, %v761, %v755
        %v767 = vsel %vm764, %v762, %v757
        %v768 = vsel %vm764, %v763, %v759
        %vm773 = vcmask 1043464
        %vm774 = vmor %vm746, %vm773
        %775 = vst.msk [vmem:[#allocation2 + $0x20] sm:$0xff] %vm774, %v765
        %776 = vst.msk [vmem:[#allocation2 + $0x28] sm:$0xff] %vm774, %v766
        %777 = vst.msk [vmem:[#allocation2 + $0x30] sm:$0xff] %vm774, %v767
        %778 = vst.msk [vmem:[#allocation2 + $0x38] sm:$0xff] %vm774, %v768
        %779 = vst [vmem:[#allocation2 + $0x40] sm:$0xff] %v716
        %780 = vst [vmem:[#allocation2 + $0x48] sm:$0xff] %v717
        %781 = vst [vmem:[#allocation2 + $0x50] sm:$0xff] %v718
        %782 = vst [vmem:[#allocation2 + $0x58] sm:$0xff] %v719
        %783 = vrot.lane.b32.xlu0 %v716, 127
        %v784 = vpop.permute.xlu0 %783
        %785 = vrot.lane.b32.xlu0 %v717, 127
        %v786 = vpop.permute.xlu0 %785
        %787 = vrot.lane.b32.xlu0 %v718, 127
        %v788 = vpop.permute.xlu0 %787
        %789 = vrot.lane.b32.xlu0 %v719, 127
        %v790 = vpop.permute.xlu0 %789
        %v791 = vrot.slane %v784, 4
        %v792 = vrot.slane %v786, 4
        %v793 = vrot.slane %v788, 4
        %v794 = vrot.slane %v790, 4
        %vm795 = vcmask 1039360
        %v796 = vsel %vm795, %v784, %v791
        %v797 = vsel %vm795, %v786, %v792
        %v798 = vsel %vm795, %v788, %v793
        %v799 = vsel %vm795, %v790, %v794
        %vm804 = vcmask 1043456
        %vm805 = vcmask 1039364
        %vm806 = vmor %vm805, %vm804
        %807 = vst.msk [vmem:[#allocation2 + $0x60] sm:$0xff] %vm806, %v796
        %808 = vst.msk [vmem:[#allocation2 + $0x68] sm:$0xff] %vm806, %v797
        %809 = vst.msk [vmem:[#allocation2 + $0x70] sm:$0xff] %vm806, %v798
        %810 = vst.msk [vmem:[#allocation2 + $0x78] sm:$0xff] %vm806, %v799
        %811 = vrot.lane.b32.xlu0 %v716, 126
        %v812 = vpop.permute.xlu0 %811
        %813 = vrot.lane.b32.xlu0 %v717, 126
        %v814 = vpop.permute.xlu0 %813
        %815 = vrot.lane.b32.xlu0 %v718, 126
        %v816 = vpop.permute.xlu0 %815
        %817 = vrot.lane.b32.xlu0 %v719, 126
        %v818 = vpop.permute.xlu0 %817
        %v819 = vrot.slane %v812, 4
        %v820 = vrot.slane %v814, 4
        %v821 = vrot.slane %v816, 4
        %v822 = vrot.slane %v818, 4
        %vm823 = vcmask 1031168
        %v824 = vsel %vm823, %v812, %v819
        %v825 = vsel %vm823, %v814, %v820
        %v826 = vsel %vm823, %v816, %v821
        %v827 = vsel %vm823, %v818, %v822
        %vm832 = vcmask 1031172
        %vm833 = vmor %vm832, %vm804
        %834 = vst.msk [vmem:[#allocation2 + $0x80] sm:$0xff] %vm833, %v824
        %835 = vst.msk [vmem:[#allocation2 + $0x88] sm:$0xff] %vm833, %v825
        %836 = vst.msk [vmem:[#allocation2 + $0x90] sm:$0xff] %vm833, %v826
        %837 = vst.msk [vmem:[#allocation2 + $0x98] sm:$0xff] %vm833, %v827
        %v838 = vld [vmem:[#allocation3] sm:$0xff]
        %v839 = vld [vmem:[#allocation3 + $0x8] sm:$0xff]
        %v840 = vld [vmem:[#allocation3 + $0x10] sm:$0xff]
        %v841 = vld [vmem:[#allocation3 + $0x18] sm:$0xff]
        %v842 = vld [vmem:[#allocation2] sm:$0xff]
        %v843 = vld [vmem:[#allocation2 + $0x8] sm:$0xff]
        %v844 = vld [vmem:[#allocation2 + $0x10] sm:$0xff]
        %v845 = vld [vmem:[#allocation2 + $0x18] sm:$0xff]
        %v846 = vld [vmem:[#allocation2 + $0x20] sm:$0xff]
        %v847 = vld [vmem:[#allocation2 + $0x28] sm:$0xff]
        %v848 = vld [vmem:[#allocation2 + $0x30] sm:$0xff]
        %v849 = vld [vmem:[#allocation2 + $0x38] sm:$0xff]
        %v850 = vld [vmem:[#allocation2 + $0x40] sm:$0xff]
        %v851 = vld [vmem:[#allocation2 + $0x48] sm:$0xff]
        %v852 = vld [vmem:[#allocation2 + $0x50] sm:$0xff]
        %v853 = vld [vmem:[#allocation2 + $0x58] sm:$0xff]
        %v854 = vld [vmem:[#allocation2 + $0x60] sm:$0xff]
        %v855 = vld [vmem:[#allocation2 + $0x68] sm:$0xff]
        %v856 = vld [vmem:[#allocation2 + $0x70] sm:$0xff]
        %v857 = vld [vmem:[#allocation2 + $0x78] sm:$0xff]
        %v858 = vld [vmem:[#allocation2 + $0x80] sm:$0xff]
        %v859 = vld [vmem:[#allocation2 + $0x88] sm:$0xff]
        %v860 = vld [vmem:[#allocation2 + $0x90] sm:$0xff]
        %v861 = vld [vmem:[#allocation2 + $0x98] sm:$0xff]
        %v866 = vunpack.c.l.b16 %v838
        %v867 = vunpack.c.h.b16 %v838
        %v868 = vunpack.c.l.b16 %v839
        %v869 = vunpack.c.h.b16 %v839
        %v870 = vunpack.c.l.b16 %v840
        %v871 = vunpack.c.h.b16 %v840
        %v872 = vunpack.c.l.b16 %v841
        %v873 = vunpack.c.h.b16 %v841
        %v874 = vpack.c.b16 %v868, %v866
        %v875 = vpack.c.b16 %v869, %v867
        %v876 = vpack.c.b16 %v872, %v870
        %v877 = vpack.c.b16 %v873, %v871
        %v900 = vunpack.c.l.b16 %v842
        %v901 = vunpack.c.h.b16 %v842
        %v902 = vunpack.c.l.b16 %v843
        %v903 = vunpack.c.h.b16 %v843
        %v904 = vunpack.c.l.b16 %v844
        %v905 = vunpack.c.h.b16 %v844
        %v906 = vunpack.c.l.b16 %v845
        %v907 = vunpack.c.h.b16 %v845
        %v908 = vunpack.c.l.b16 %v846
        %v909 = vunpack.c.h.b16 %v846
        %v910 = vunpack.c.l.b16 %v847
        %v911 = vunpack.c.h.b16 %v847
        %v912 = vunpack.c.l.b16 %v848
        %v913 = vunpack.c.h.b16 %v848
        %v914 = vunpack.c.l.b16 %v849
        %v915 = vunpack.c.h.b16 %v849
        %v916 = vunpack.c.l.b16 %v850
        %v917 = vunpack.c.h.b16 %v850
        %v918 = vunpack.c.l.b16 %v851
        %v919 = vunpack.c.h.b16 %v851
        %v920 = vunpack.c.l.b16 %v852
        %v921 = vunpack.c.h.b16 %v852
        %v922 = vunpack.c.l.b16 %v853
        %v923 = vunpack.c.h.b16 %v853
        %v924 = vunpack.c.l.b16 %v854
        %v925 = vunpack.c.h.b16 %v854
        %v926 = vunpack.c.l.b16 %v855
        %v927 = vunpack.c.h.b16 %v855
        %v928 = vunpack.c.l.b16 %v856
        %v929 = vunpack.c.h.b16 %v856
        %v930 = vunpack.c.l.b16 %v857
        %v931 = vunpack.c.h.b16 %v857
        %v932 = vunpack.c.l.b16 %v858
        %v933 = vunpack.c.h.b16 %v858
        %v934 = vunpack.c.l.b16 %v859
        %v935 = vunpack.c.h.b16 %v859
        %v936 = vunpack.c.l.b16 %v860
        %v937 = vunpack.c.h.b16 %v860
        %v938 = vunpack.c.l.b16 %v861
        %v939 = vunpack.c.h.b16 %v861
        %v940 = vpack.c.b16 %v902, %v900
        %v941 = vpack.c.b16 %v903, %v901
        %v942 = vpack.c.b16 %v906, %v904
        %v943 = vpack.c.b16 %v907, %v905
        %v944 = vpack.c.b16 %v910, %v908
        %v945 = vpack.c.b16 %v911, %v909
        %v946 = vpack.c.b16 %v914, %v912
        %v947 = vpack.c.b16 %v915, %v913
        %v948 = vpack.c.b16 %v918, %v916
        %v949 = vpack.c.b16 %v919, %v917
        %v950 = vpack.c.b16 %v922, %v920
        %v951 = vpack.c.b16 %v923, %v921
        %v952 = vpack.c.b16 %v926, %v924
        %v953 = vpack.c.b16 %v927, %v925
        %v954 = vpack.c.b16 %v930, %v928
        %v955 = vpack.c.b16 %v931, %v929
        %v956 = vpack.c.b16 %v934, %v932
        %v957 = vpack.c.b16 %v935, %v933
        %v958 = vpack.c.b16 %v938, %v936
        %v959 = vpack.c.b16 %v939, %v937
        %vm980 = vcmask 261120
        %v982 = vsel %vm980, %v875, 0
        %v985 = vsel %vm980, %v877, 0
        %987 = vmatprep.subr.bf16.mxu0 %v955
        %988 = vmatpush1.bf16.msra.mxu0 %v954
        %989 = vmatprep.subr.bf16.mxu0 %v953
        %990 = vmatpush1.bf16.msra.mxu0 %v952
        %991 = vmatprep.subr.bf16.mxu0 %v951
        %992 = vmatpush1.bf16.msra.mxu0 %v950
        %993 = vmatprep.subr.bf16.mxu0 %v949
        %994 = vmatpush1.bf16.msra.mxu0 %v948
        %995 = vmatprep.subr.bf16.mxu0 %v947
        %996 = vmatpush1.bf16.msra.mxu0 %v946
        %997 = vmatprep.subr.bf16.mxu0 %v945
        %998 = vmatpush1.bf16.msra.mxu0 %v944
        %999 = vmatprep.subr.bf16.mxu0 %v943
        %1000 = vmatpush1.bf16.msra.mxu0 %v942
        %1001 = vmatprep.subr.bf16.mxu0 %v941
        %1002 = vmatpush1.bf16.msra.mxu0 %v940
        %1003 = vmatprep.subr.bf16.mxu0 0
        %1004 = vmatpush2.bf16.msra.mxu0 0
        %1005 = vmatprep.subr.bf16.mxu0 0
        %1006 = vmatpush2.bf16.msra.mxu0 0
        %1007 = vmatprep.subr.bf16.mxu0 0
        %1008 = vmatpush2.bf16.msra.mxu0 0
        %1009 = vmatprep.subr.bf16.mxu0 0
        %1010 = vmatpush2.bf16.msra.mxu0 0
        %1011 = vmatprep.subr.bf16.mxu0 0
        %1012 = vmatpush2.bf16.msra.mxu0 0
        %1013 = vmatprep.subr.bf16.mxu0 0
        %1014 = vmatpush2.bf16.msra.mxu0 0
        %1015 = vmatprep.subr.bf16.mxu0 %v959
        %1016 = vmatpush2.bf16.msra.mxu0 %v958
        %1017 = vmatprep.subr.bf16.mxu0 %v957
        %1018 = vmatpush2.bf16.msra.mxu0 %v956
        %1019 = vmatprep.mubr.bf16.mxu0 %v982
        %1020 = vmatmul.mubr.bf16.gmra.mxu0 %v874
        %v1021 = vpop.f32.mrf.mxu0
        %v1022 = vadd.f32 0.0, %v1021
        %v1023 = vpop.f32.mrf.mxu0
        %v1024 = vadd.f32 0.0, %v1023
        %v1025 = vpop.f32.mrf.mxu0
        %v1026 = vadd.f32 0.0, %v1025
        %v1027 = vpop.f32.mrf.mxu0
        %v1028 = vadd.f32 0.0, %v1027
        %1029 = vmatprep.mubr.bf16.mxu0 %v985
        %1030 = vmatmul.mubr.bf16.gmra.mxu0 %v876
        %v1031 = vpop.f32.mrf.mxu0
        %v1032 = vadd.f32 0.0, %v1031
        %v1033 = vpop.f32.mrf.mxu0
        %v1034 = vadd.f32 0.0, %v1033
        %v1035 = vpop.f32.mrf.mxu0
        %v1036 = vadd.f32 0.0, %v1035
        %v1037 = vpop.f32.mrf.mxu0
        %v1038 = vadd.f32 0.0, %v1037
        %1039 = vdwg.mxu0
        %v1040 = vld [vmem:[#allocation6] sm:$0xff]
        %v1041 = vld [vmem:[#allocation6 + $0x8] sm:$0xff]
        %v1042 = vld [vmem:[#allocation6 + $0x10] sm:$0xff]
        %v1043 = vld [vmem:[#allocation6 + $0x18] sm:$0xff]
        %1045 = vset.pattern.permute.xlu0 0
        %1046 = vperm.xlu0 %1045, %v1040
        %v1047 = vpop.permute.xlu0 %1046
        %1050 = vset.pattern.permute.xlu0 0
        %1051 = vperm.xlu0 %1050, %v1041
        %v1052 = vpop.permute.xlu0 %1051
        %1055 = vset.pattern.permute.xlu0 0
        %1056 = vperm.xlu0 %1055, %v1042
        %v1057 = vpop.permute.xlu0 %1056
        %1060 = vset.pattern.permute.xlu0 0
        %1061 = vperm.xlu0 %1060, %v1043
        %v1062 = vpop.permute.xlu0 %1061
        %v1064 = vmul.f32 %v1022, %v1047
        %v1065 = vmul.f32 %v1024, %v1047
        %v1066 = vmul.f32 %v1026, %v1052
        %v1067 = vmul.f32 %v1028, %v1052
        %v1068 = vmul.f32 %v1032, %v1057
        %v1069 = vmul.f32 %v1034, %v1057
        %v1070 = vmul.f32 %v1036, %v1062
        %v1071 = vmul.f32 %v1038, %v1062
        %v1072 = vld [vmem:[#allocation8] sm:$0xff]
        %v1073 = vld [vmem:[#allocation8 + $0x8] sm:$0xff]
        %v1074 = vld [vmem:[#allocation8 + $0x10] sm:$0xff]
        %v1075 = vld [vmem:[#allocation8 + $0x18] sm:$0xff]
        %1077 = vset.pattern.permute.xlu0 0
        %1078 = vperm.xlu0 %1077, %v1072
        %v1079 = vpop.permute.xlu0 %1078
        %1082 = vset.pattern.permute.xlu0 0
        %1083 = vperm.xlu0 %1082, %v1073
        %v1084 = vpop.permute.xlu0 %1083
        %1087 = vset.pattern.permute.xlu0 0
        %1088 = vperm.xlu0 %1087, %v1074
        %v1089 = vpop.permute.xlu0 %1088
        %1092 = vset.pattern.permute.xlu0 0
        %1093 = vperm.xlu0 %1092, %v1075
        %v1094 = vpop.permute.xlu0 %1093
        %v1096 = vadd.f32 %v1064, %v1079
        %v1097 = vadd.f32 %v1065, %v1079
        %v1098 = vadd.f32 %v1066, %v1084
        %v1099 = vadd.f32 %v1067, %v1084
        %v1100 = vadd.f32 %v1068, %v1089
        %v1101 = vadd.f32 %v1069, %v1089
        %v1102 = vadd.f32 %v1070, %v1094
        %v1103 = vadd.f32 %v1071, %v1094
        %v1104 = vmax.f32 %v1096, 0.0
        %v1105 = vmax.f32 %v1097, 0.0
        %v1106 = vmax.f32 %v1098, 0.0
        %v1107 = vmax.f32 %v1099, 0.0
        %v1108 = vmax.f32 %v1100, 0.0
        %v1109 = vmax.f32 %v1101, 0.0
        %v1110 = vmax.f32 %v1102, 0.0
        %v1111 = vmax.f32 %v1103, 0.0
        %v1112 = vpack.c.bf16 %v1106, %v1104
        %v1113 = vpack.c.bf16 %v1107, %v1105
        %v1114 = vpack.c.bf16 %v1110, %v1108
        %v1115 = vpack.c.bf16 %v1111, %v1109
        %v1120 = vunpack.c.l.b16 %v1112
        %v1121 = vunpack.c.l.b16 %v1113
        %v1122 = vunpack.c.h.b16 %v1112
        %v1123 = vunpack.c.h.b16 %v1113
        %v1124 = vunpack.c.l.b16 %v1114
        %v1125 = vunpack.c.l.b16 %v1115
        %v1126 = vunpack.c.h.b16 %v1114
        %v1127 = vunpack.c.h.b16 %v1115
        %v1128 = vpack.c.b16 %v1121, %v1120
        %v1129 = vpack.c.b16 %v1123, %v1122
        %v1130 = vpack.c.b16 %v1125, %v1124
        %v1131 = vpack.c.b16 %v1127, %v1126
        %1132 = vrot.lane.b32.xlu0 %v1128, 2
        %v1133 = vpop.permute.xlu0 %1132
        %1134 = vrot.lane.b32.xlu0 %v1129, 2
        %v1135 = vpop.permute.xlu0 %1134
        %1136 = vrot.lane.b32.xlu0 %v1130, 2
        %v1137 = vpop.permute.xlu0 %1136
        %1138 = vrot.lane.b32.xlu0 %v1131, 2
        %v1139 = vpop.permute.xlu0 %1138
        %v1140 = vrot.slane %v1133, 4
        %v1141 = vrot.slane %v1135, 4
        %v1142 = vrot.slane %v1137, 4
        %v1143 = vrot.slane %v1139, 4
        %v1144 = vsel %vm736, %v1140, %v1133
        %v1145 = vsel %vm736, %v1141, %v1135
        %v1146 = vsel %vm736, %v1142, %v1137
        %v1147 = vsel %vm736, %v1143, %v1139
        %1152 = vst.msk [vmem:[#allocation2] sm:$0xff] %vm747, %v1144
        %1153 = vst.msk [vmem:[#allocation2 + $0x8] sm:$0xff] %vm747, %v1145
        %1154 = vst.msk [vmem:[#allocation2 + $0x10] sm:$0xff] %vm747, %v1146
        %1155 = vst.msk [vmem:[#allocation2 + $0x18] sm:$0xff] %vm747, %v1147
        %1156 = vrot.lane.b32.xlu0 %v1128, 1
        %v1157 = vpop.permute.xlu0 %1156
        %1158 = vrot.lane.b32.xlu0 %v1129, 1
        %v1159 = vpop.permute.xlu0 %1158
        %1160 = vrot.lane.b32.xlu0 %v1130, 1
        %v1161 = vpop.permute.xlu0 %1160
        %1162 = vrot.lane.b32.xlu0 %v1131, 1
        %v1163 = vpop.permute.xlu0 %1162
        %v1164 = vrot.slane %v1157, 4
        %v1165 = vrot.slane %v1159, 4
        %v1166 = vrot.slane %v1161, 4
        %v1167 = vrot.slane %v1163, 4
        %v1168 = vsel %vm764, %v1164, %v1157
        %v1169 = vsel %vm764, %v1165, %v1159
        %v1170 = vsel %vm764, %v1166, %v1161
        %v1171 = vsel %vm764, %v1167, %v1163
        %1176 = vst.msk [vmem:[#allocation2 + $0x20] sm:$0xff] %vm774, %v1168
        %1177 = vst.msk [vmem:[#allocation2 + $0x28] sm:$0xff] %vm774, %v1169
        %1178 = vst.msk [vmem:[#allocation2 + $0x30] sm:$0xff] %vm774, %v1170
        %1179 = vst.msk [vmem:[#allocation2 + $0x38] sm:$0xff] %vm774, %v1171
        %1184 = vst [vmem:[#allocation2 + $0x40] sm:$0xff] %v1128
        %1185 = vst [vmem:[#allocation2 + $0x48] sm:$0xff] %v1129
        %1186 = vst [vmem:[#allocation2 + $0x50] sm:$0xff] %v1130
        %1187 = vst [vmem:[#allocation2 + $0x58] sm:$0xff] %v1131
        %1188 = vrot.lane.b32.xlu0 %v1128, 127
        %v1189 = vpop.permute.xlu0 %1188
        %1190 = vrot.lane.b32.xlu0 %v1129, 127
        %v1191 = vpop.permute.xlu0 %1190
        %1192 = vrot.lane.b32.xlu0 %v1130, 127
        %v1193 = vpop.permute.xlu0 %1192
        %1194 = vrot.lane.b32.xlu0 %v1131, 127
        %v1195 = vpop.permute.xlu0 %1194
        %v1196 = vrot.slane %v1189, 4
        %v1197 = vrot.slane %v1191, 4
        %v1198 = vrot.slane %v1193, 4
        %v1199 = vrot.slane %v1195, 4
        %v1200 = vsel %vm795, %v1189, %v1196
        %v1201 = vsel %vm795, %v1191, %v1197
        %v1202 = vsel %vm795, %v1193, %v1198
        %v1203 = vsel %vm795, %v1195, %v1199
        %1208 = vst.msk [vmem:[#allocation2 + $0x60] sm:$0xff] %vm806, %v1200
        %1209 = vst.msk [vmem:[#allocation2 + $0x68] sm:$0xff] %vm806, %v1201
        %1210 = vst.msk [vmem:[#allocation2 + $0x70] sm:$0xff] %vm806, %v1202
        %1211 = vst.msk [vmem:[#allocation2 + $0x78] sm:$0xff] %vm806, %v1203
        %1212 = vrot.lane.b32.xlu0 %v1128, 126
        %v1213 = vpop.permute.xlu0 %1212
        %1214 = vrot.lane.b32.xlu0 %v1129, 126
        %v1215 = vpop.permute.xlu0 %1214
        %1216 = vrot.lane.b32.xlu0 %v1130, 126
        %v1217 = vpop.permute.xlu0 %1216
        %1218 = vrot.lane.b32.xlu0 %v1131, 126
        %v1219 = vpop.permute.xlu0 %1218
        %v1220 = vrot.slane %v1213, 4
        %v1221 = vrot.slane %v1215, 4
        %v1222 = vrot.slane %v1217, 4
        %v1223 = vrot.slane %v1219, 4
        %v1224 = vsel %vm823, %v1213, %v1220
        %v1225 = vsel %vm823, %v1215, %v1221
        %v1226 = vsel %vm823, %v1217, %v1222
        %v1227 = vsel %vm823, %v1219, %v1223
        %1232 = vst.msk [vmem:[#allocation2 + $0x80] sm:$0xff] %vm833, %v1224
        %1233 = vst.msk [vmem:[#allocation2 + $0x88] sm:$0xff] %vm833, %v1225
        %1234 = vst.msk [vmem:[#allocation2 + $0x90] sm:$0xff] %vm833, %v1226
        %1235 = vst.msk [vmem:[#allocation2 + $0x98] sm:$0xff] %vm833, %v1227
        %v1236 = vld [vmem:[#allocation9] sm:$0xff]
        %v1237 = vld [vmem:[#allocation9 + $0x8] sm:$0xff]
        %v1238 = vld [vmem:[#allocation9 + $0x10] sm:$0xff]
        %v1239 = vld [vmem:[#allocation9 + $0x18] sm:$0xff]
        %v1240 = vld [vmem:[#allocation2] sm:$0xff]
        %v1241 = vld [vmem:[#allocation2 + $0x8] sm:$0xff]
        %v1242 = vld [vmem:[#allocation2 + $0x10] sm:$0xff]
        %v1243 = vld [vmem:[#allocation2 + $0x18] sm:$0xff]
        %v1244 = vld [vmem:[#allocation2 + $0x20] sm:$0xff]
        %v1245 = vld [vmem:[#allocation2 + $0x28] sm:$0xff]
        %v1246 = vld [vmem:[#allocation2 + $0x30] sm:$0xff]
        %v1247 = vld [vmem:[#allocation2 + $0x38] sm:$0xff]
        %v1248 = vld [vmem:[#allocation2 + $0x40] sm:$0xff]
        %v1249 = vld [vmem:[#allocation2 + $0x48] sm:$0xff]
        %v1250 = vld [vmem:[#allocation2 + $0x50] sm:$0xff]
        %v1251 = vld [vmem:[#allocation2 + $0x58] sm:$0xff]
        %v1252 = vld [vmem:[#allocation2 + $0x60] sm:$0xff]
        %v1253 = vld [vmem:[#allocation2 + $0x68] sm:$0xff]
        %v1254 = vld [vmem:[#allocation2 + $0x70] sm:$0xff]
        %v1255 = vld [vmem:[#allocation2 + $0x78] sm:$0xff]
        %v1256 = vld [vmem:[#allocation2 + $0x80] sm:$0xff]
        %v1257 = vld [vmem:[#allocation2 + $0x88] sm:$0xff]
        %v1258 = vld [vmem:[#allocation2 + $0x90] sm:$0xff]
        %v1259 = vld [vmem:[#allocation2 + $0x98] sm:$0xff]
        %v1264 = vunpack.c.l.b16 %v1236
        %v1265 = vunpack.c.h.b16 %v1236
        %v1266 = vunpack.c.l.b16 %v1237
        %v1267 = vunpack.c.h.b16 %v1237
        %v1268 = vunpack.c.l.b16 %v1238
        %v1269 = vunpack.c.h.b16 %v1238
        %v1270 = vunpack.c.l.b16 %v1239
        %v1271 = vunpack.c.h.b16 %v1239
        %v1272 = vpack.c.b16 %v1266, %v1264
        %v1273 = vpack.c.b16 %v1267, %v1265
        %v1274 = vpack.c.b16 %v1270, %v1268
        %v1275 = vpack.c.b16 %v1271, %v1269
        %v1298 = vunpack.c.l.b16 %v1240
        %v1299 = vunpack.c.h.b16 %v1240
        %v1300 = vunpack.c.l.b16 %v1241
        %v1301 = vunpack.c.h.b16 %v1241
        %v1302 = vunpack.c.l.b16 %v1242
        %v1303 = vunpack.c.h.b16 %v1242
        %v1304 = vunpack.c.l.b16 %v1243
        %v1305 = vunpack.c.h.b16 %v1243
        %v1306 = vunpack.c.l.b16 %v1244
        %v1307 = vunpack.c.h.b16 %v1244
        %v1308 = vunpack.c.l.b16 %v1245
        %v1309 = vunpack.c.h.b16 %v1245
        %v1310 = vunpack.c.l.b16 %v1246
        %v1311 = vunpack.c.h.b16 %v1246
        %v1312 = vunpack.c.l.b16 %v1247
        %v1313 = vunpack.c.h.b16 %v1247
        %v1314 = vunpack.c.l.b16 %v1248
        %v1315 = vunpack.c.h.b16 %v1248
        %v1316 = vunpack.c.l.b16 %v1249
        %v1317 = vunpack.c.h.b16 %v1249
        %v1318 = vunpack.c.l.b16 %v1250
        %v1319 = vunpack.c.h.b16 %v1250
        %v1320 = vunpack.c.l.b16 %v1251
        %v1321 = vunpack.c.h.b16 %v1251
        %v1322 = vunpack.c.l.b16 %v1252
        %v1323 = vunpack.c.h.b16 %v1252
        %v1324 = vunpack.c.l.b16 %v1253
        %v1325 = vunpack.c.h.b16 %v1253
        %v1326 = vunpack.c.l.b16 %v1254
        %v1327 = vunpack.c.h.b16 %v1254
        %v1328 = vunpack.c.l.b16 %v1255
        %v1329 = vunpack.c.h.b16 %v1255
        %v1330 = vunpack.c.l.b16 %v1256
        %v1331 = vunpack.c.h.b16 %v1256
        %v1332 = vunpack.c.l.b16 %v1257
        %v1333 = vunpack.c.h.b16 %v1257
        %v1334 = vunpack.c.l.b16 %v1258
        %v1335 = vunpack.c.h.b16 %v1258
        %v1336 = vunpack.c.l.b16 %v1259
        %v1337 = vunpack.c.h.b16 %v1259
        %v1338 = vpack.c.b16 %v1300, %v1298
        %v1339 = vpack.c.b16 %v1301, %v1299
        %v1340 = vpack.c.b16 %v1304, %v1302
        %v1341 = vpack.c.b16 %v1305, %v1303
        %v1342 = vpack.c.b16 %v1308, %v1306
        %v1343 = vpack.c.b16 %v1309, %v1307
        %v1344 = vpack.c.b16 %v1312, %v1310
        %v1345 = vpack.c.b16 %v1313, %v1311
        %v1346 = vpack.c.b16 %v1316, %v1314
        %v1347 = vpack.c.b16 %v1317, %v1315
        %v1348 = vpack.c.b16 %v1320, %v1318
        %v1349 = vpack.c.b16 %v1321, %v1319
        %v1350 = vpack.c.b16 %v1324, %v1322
        %v1351 = vpack.c.b16 %v1325, %v1323
        %v1352 = vpack.c.b16 %v1328, %v1326
        %v1353 = vpack.c.b16 %v1329, %v1327
        %v1354 = vpack.c.b16 %v1332, %v1330
        %v1355 = vpack.c.b16 %v1333, %v1331
        %v1356 = vpack.c.b16 %v1336, %v1334
        %v1357 = vpack.c.b16 %v1337, %v1335
        %v1379 = vsel %vm980, %v1273, 0
        %v1382 = vsel %vm980, %v1275, 0
        %1384 = vmatprep.subr.bf16.mxu0 %v1353
        %1385 = vmatpush1.bf16.msra.mxu0 %v1352
        %1386 = vmatprep.subr.bf16.mxu0 %v1351
        %1387 = vmatpush1.bf16.msra.mxu0 %v1350
        %1388 = vmatprep.subr.bf16.mxu0 %v1349
        %1389 = vmatpush1.bf16.msra.mxu0 %v1348
        %1390 = vmatprep.subr.bf16.mxu0 %v1347
        %1391 = vmatpush1.bf16.msra.mxu0 %v1346
        %1392 = vmatprep.subr.bf16.mxu0 %v1345
        %1393 = vmatpush1.bf16.msra.mxu0 %v1344
        %1394 = vmatprep.subr.bf16.mxu0 %v1343
        %1395 = vmatpush1.bf16.msra.mxu0 %v1342
        %1396 = vmatprep.subr.bf16.mxu0 %v1341
        %1397 = vmatpush1.bf16.msra.mxu0 %v1340
        %1398 = vmatprep.subr.bf16.mxu0 %v1339
        %1399 = vmatpush1.bf16.msra.mxu0 %v1338
        %1400 = vmatprep.subr.bf16.mxu0 0
        %1401 = vmatpush2.bf16.msra.mxu0 0
        %1402 = vmatprep.subr.bf16.mxu0 0
        %1403 = vmatpush2.bf16.msra.mxu0 0
        %1404 = vmatprep.subr.bf16.mxu0 0
        %1405 = vmatpush2.bf16.msra.mxu0 0
        %1406 = vmatprep.subr.bf16.mxu0 0
        %1407 = vmatpush2.bf16.msra.mxu0 0
        %1408 = vmatprep.subr.bf16.mxu0 0
        %1409 = vmatpush2.bf16.msra.mxu0 0
        %1410 = vmatprep.subr.bf16.mxu0 0
        %1411 = vmatpush2.bf16.msra.mxu0 0
        %1412 = vmatprep.subr.bf16.mxu0 %v1357
        %1413 = vmatpush2.bf16.msra.mxu0 %v1356
        %1414 = vmatprep.subr.bf16.mxu0 %v1355
        %1415 = vmatpush2.bf16.msra.mxu0 %v1354
        %1416 = vmatprep.mubr.bf16.mxu0 %v1379
        %1417 = vmatmul.mubr.bf16.gmra.mxu0 %v1272
        %v1418 = vpop.f32.mrf.mxu0
        %v1419 = vadd.f32 0.0, %v1418
        %v1420 = vpop.f32.mrf.mxu0
        %v1421 = vadd.f32 0.0, %v1420
        %v1422 = vpop.f32.mrf.mxu0
        %v1423 = vadd.f32 0.0, %v1422
        %v1424 = vpop.f32.mrf.mxu0
        %v1425 = vadd.f32 0.0, %v1424
        %1426 = vmatprep.mubr.bf16.mxu0 %v1382
        %1427 = vmatmul.mubr.bf16.gmra.mxu0 %v1274
        %v1428 = vpop.f32.mrf.mxu0
        %v1429 = vadd.f32 0.0, %v1428
        %v1430 = vpop.f32.mrf.mxu0
        %v1431 = vadd.f32 0.0, %v1430
        %v1432 = vpop.f32.mrf.mxu0
        %v1433 = vadd.f32 0.0, %v1432
        %v1434 = vpop.f32.mrf.mxu0
        %v1435 = vadd.f32 0.0, %v1434
        %1436 = vdwg.mxu0
        %v1437 = vld [vmem:[#allocation11] sm:$0xff]
        %v1438 = vld [vmem:[#allocation11 + $0x8] sm:$0xff]
        %v1439 = vld [vmem:[#allocation11 + $0x10] sm:$0xff]
        %v1440 = vld [vmem:[#allocation11 + $0x18] sm:$0xff]
        %1442 = vset.pattern.permute.xlu0 0
        %1443 = vperm.xlu0 %1442, %v1437
        %v1444 = vpop.permute.xlu0 %1443
        %1447 = vset.pattern.permute.xlu0 0
        %1448 = vperm.xlu0 %1447, %v1438
        %v1449 = vpop.permute.xlu0 %1448
        %1452 = vset.pattern.permute.xlu0 0
        %1453 = vperm.xlu0 %1452, %v1439
        %v1454 = vpop.permute.xlu0 %1453
        %1457 = vset.pattern.permute.xlu0 0
        %1458 = vperm.xlu0 %1457, %v1440
        %v1459 = vpop.permute.xlu0 %1458
        %v1461 = vmul.f32 %v1419, %v1444
        %v1462 = vmul.f32 %v1421, %v1444
        %v1463 = vmul.f32 %v1423, %v1449
        %v1464 = vmul.f32 %v1425, %v1449
        %v1465 = vmul.f32 %v1429, %v1454
        %v1466 = vmul.f32 %v1431, %v1454
        %v1467 = vmul.f32 %v1433, %v1459
        %v1468 = vmul.f32 %v1435, %v1459
        %v1469 = vld [vmem:[#allocation12] sm:$0xff]
        %v1470 = vld [vmem:[#allocation12 + $0x8] sm:$0xff]
        %v1471 = vld [vmem:[#allocation12 + $0x10] sm:$0xff]
        %v1472 = vld [vmem:[#allocation12 + $0x18] sm:$0xff]
        %1474 = vset.pattern.permute.xlu0 0
        %1475 = vperm.xlu0 %1474, %v1469
        %v1476 = vpop.permute.xlu0 %1475
        %1479 = vset.pattern.permute.xlu0 0
        %1480 = vperm.xlu0 %1479, %v1470
        %v1481 = vpop.permute.xlu0 %1480
        %1484 = vset.pattern.permute.xlu0 0
        %1485 = vperm.xlu0 %1484, %v1471
        %v1486 = vpop.permute.xlu0 %1485
        %1489 = vset.pattern.permute.xlu0 0
        %1490 = vperm.xlu0 %1489, %v1472
        %v1491 = vpop.permute.xlu0 %1490
        %v1493 = vadd.f32 %v1461, %v1476
        %v1494 = vadd.f32 %v1462, %v1476
        %v1495 = vadd.f32 %v1463, %v1481
        %v1496 = vadd.f32 %v1464, %v1481
        %v1497 = vadd.f32 %v1465, %v1486
        %v1498 = vadd.f32 %v1466, %v1486
        %v1499 = vadd.f32 %v1467, %v1491
        %v1500 = vadd.f32 %v1468, %v1491
        %v1501 = vmax.f32 %v1493, 0.0
        %v1502 = vmax.f32 %v1494, 0.0
        %v1503 = vmax.f32 %v1495, 0.0
        %v1504 = vmax.f32 %v1496, 0.0
        %v1505 = vmax.f32 %v1497, 0.0
        %v1506 = vmax.f32 %v1498, 0.0
        %v1507 = vmax.f32 %v1499, 0.0
        %v1508 = vmax.f32 %v1500, 0.0
        %v1509 = vpack.c.bf16 %v1503, %v1501
        %v1510 = vpack.c.bf16 %v1504, %v1502
        %v1511 = vpack.c.bf16 %v1507, %v1505
        %v1512 = vpack.c.bf16 %v1508, %v1506
        %v1517 = vunpack.c.l.b16 %v1509
        %v1518 = vunpack.c.l.b16 %v1510
        %v1519 = vunpack.c.h.b16 %v1509
        %v1520 = vunpack.c.h.b16 %v1510
        %v1521 = vunpack.c.l.b16 %v1511
        %v1522 = vunpack.c.l.b16 %v1512
        %v1523 = vunpack.c.h.b16 %v1511
        %v1524 = vunpack.c.h.b16 %v1512
        %v1525 = vpack.c.b16 %v1518, %v1517
        %v1526 = vpack.c.b16 %v1520, %v1519
        %v1527 = vpack.c.b16 %v1522, %v1521
        %v1528 = vpack.c.b16 %v1524, %v1523
        %1529 = vrot.lane.b32.xlu0 %v1525, 2
        %v1530 = vpop.permute.xlu0 %1529
        %1531 = vrot.lane.b32.xlu0 %v1526, 2
        %v1532 = vpop.permute.xlu0 %1531
        %1533 = vrot.lane.b32.xlu0 %v1527, 2
        %v1534 = vpop.permute.xlu0 %1533
        %1535 = vrot.lane.b32.xlu0 %v1528, 2
        %v1536 = vpop.permute.xlu0 %1535
        %v1537 = vrot.slane %v1530, 4
        %v1538 = vrot.slane %v1532, 4
        %v1539 = vrot.slane %v1534, 4
        %v1540 = vrot.slane %v1536, 4
        %v1541 = vsel %vm736, %v1537, %v1530
        %v1542 = vsel %vm736, %v1538, %v1532
        %v1543 = vsel %vm736, %v1539, %v1534
        %v1544 = vsel %vm736, %v1540, %v1536
        %1549 = vst.msk [vmem:[#allocation2] sm:$0xff] %vm747, %v1541
        %1550 = vst.msk [vmem:[#allocation2 + $0x8] sm:$0xff] %vm747, %v1542
        %1551 = vst.msk [vmem:[#allocation2 + $0x10] sm:$0xff] %vm747, %v1543
        %1552 = vst.msk [vmem:[#allocation2 + $0x18] sm:$0xff] %vm747, %v1544
        %1553 = vrot.lane.b32.xlu0 %v1525, 1
        %v1554 = vpop.permute.xlu0 %1553
        %1555 = vrot.lane.b32.xlu0 %v1526, 1
        %v1556 = vpop.permute.xlu0 %1555
        %1557 = vrot.lane.b32.xlu0 %v1527, 1
        %v1558 = vpop.permute.xlu0 %1557
        %1559 = vrot.lane.b32.xlu0 %v1528, 1
        %v1560 = vpop.permute.xlu0 %1559
        %v1561 = vrot.slane %v1554, 4
        %v1562 = vrot.slane %v1556, 4
        %v1563 = vrot.slane %v1558, 4
        %v1564 = vrot.slane %v1560, 4
        %v1565 = vsel %vm764, %v1561, %v1554
        %v1566 = vsel %vm764, %v1562, %v1556
        %v1567 = vsel %vm764, %v1563, %v1558
        %v1568 = vsel %vm764, %v1564, %v1560
        %1573 = vst.msk [vmem:[#allocation2 + $0x20] sm:$0xff] %vm774, %v1565
        %1574 = vst.msk [vmem:[#allocation2 + $0x28] sm:$0xff] %vm774, %v1566
        %1575 = vst.msk [vmem:[#allocation2 + $0x30] sm:$0xff] %vm774, %v1567
        %1576 = vst.msk [vmem:[#allocation2 + $0x38] sm:$0xff] %vm774, %v1568
        %1581 = vst [vmem:[#allocation2 + $0x40] sm:$0xff] %v1525
        %1582 = vst [vmem:[#allocation2 + $0x48] sm:$0xff] %v1526
        %1583 = vst [vmem:[#allocation2 + $0x50] sm:$0xff] %v1527
        %1584 = vst [vmem:[#allocation2 + $0x58] sm:$0xff] %v1528
        %1585 = vrot.lane.b32.xlu0 %v1525, 127
        %v1586 = vpop.permute.xlu0 %1585
        %1587 = vrot.lane.b32.xlu0 %v1526, 127
        %v1588 = vpop.permute.xlu0 %1587
        %1589 = vrot.lane.b32.xlu0 %v1527, 127
        %v1590 = vpop.permute.xlu0 %1589
        %1591 = vrot.lane.b32.xlu0 %v1528, 127
        %v1592 = vpop.permute.xlu0 %1591
        %v1593 = vrot.slane %v1586, 4
        %v1594 = vrot.slane %v1588, 4
        %v1595 = vrot.slane %v1590, 4
        %v1596 = vrot.slane %v1592, 4
        %v1597 = vsel %vm795, %v1586, %v1593
        %v1598 = vsel %vm795, %v1588, %v1594
        %v1599 = vsel %vm795, %v1590, %v1595
        %v1600 = vsel %vm795, %v1592, %v1596
        %1605 = vst.msk [vmem:[#allocation2 + $0x60] sm:$0xff] %vm806, %v1597
        %1606 = vst.msk [vmem:[#allocation2 + $0x68] sm:$0xff] %vm806, %v1598
        %1607 = vst.msk [vmem:[#allocation2 + $0x70] sm:$0xff] %vm806, %v1599
        %1608 = vst.msk [vmem:[#allocation2 + $0x78] sm:$0xff] %vm806, %v1600
        %1609 = vrot.lane.b32.xlu0 %v1525, 126
        %v1610 = vpop.permute.xlu0 %1609
        %1611 = vrot.lane.b32.xlu0 %v1526, 126
        %v1612 = vpop.permute.xlu0 %1611
        %1613 = vrot.lane.b32.xlu0 %v1527, 126
        %v1614 = vpop.permute.xlu0 %1613
        %1615 = vrot.lane.b32.xlu0 %v1528, 126
        %v1616 = vpop.permute.xlu0 %1615
        %v1617 = vrot.slane %v1610, 4
        %v1618 = vrot.slane %v1612, 4
        %v1619 = vrot.slane %v1614, 4
        %v1620 = vrot.slane %v1616, 4
        %v1621 = vsel %vm823, %v1610, %v1617
        %v1622 = vsel %vm823, %v1612, %v1618
        %v1623 = vsel %vm823, %v1614, %v1619
        %v1624 = vsel %vm823, %v1616, %v1620
        %1629 = vst.msk [vmem:[#allocation2 + $0x80] sm:$0xff] %vm833, %v1621
        %1630 = vst.msk [vmem:[#allocation2 + $0x88] sm:$0xff] %vm833, %v1622
        %1631 = vst.msk [vmem:[#allocation2 + $0x90] sm:$0xff] %vm833, %v1623
        %1632 = vst.msk [vmem:[#allocation2 + $0x98] sm:$0xff] %vm833, %v1624
        %v1633 = vld [vmem:[#allocation14] sm:$0xff]
        %v1634 = vld [vmem:[#allocation14 + $0x8] sm:$0xff]
        %v1635 = vld [vmem:[#allocation14 + $0x10] sm:$0xff]
        %v1636 = vld [vmem:[#allocation14 + $0x18] sm:$0xff]
        %v1637 = vld [vmem:[#allocation2] sm:$0xff]
        %v1638 = vld [vmem:[#allocation2 + $0x8] sm:$0xff]
        %v1639 = vld [vmem:[#allocation2 + $0x10] sm:$0xff]
        %v1640 = vld [vmem:[#allocation2 + $0x18] sm:$0xff]
        %v1641 = vld [vmem:[#allocation2 + $0x20] sm:$0xff]
        %v1642 = vld [vmem:[#allocation2 + $0x28] sm:$0xff]
        %v1643 = vld [vmem:[#allocation2 + $0x30] sm:$0xff]
        %v1644 = vld [vmem:[#allocation2 + $0x38] sm:$0xff]
        %v1645 = vld [vmem:[#allocation2 + $0x40] sm:$0xff]
        %v1646 = vld [vmem:[#allocation2 + $0x48] sm:$0xff]
        %v1647 = vld [vmem:[#allocation2 + $0x50] sm:$0xff]
        %v1648 = vld [vmem:[#allocation2 + $0x58] sm:$0xff]
        %v1649 = vld [vmem:[#allocation2 + $0x60] sm:$0xff]
        %v1650 = vld [vmem:[#allocation2 + $0x68] sm:$0xff]
        %v1651 = vld [vmem:[#allocation2 + $0x70] sm:$0xff]
        %v1652 = vld [vmem:[#allocation2 + $0x78] sm:$0xff]
        %v1653 = vld [vmem:[#allocation2 + $0x80] sm:$0xff]
        %v1654 = vld [vmem:[#allocation2 + $0x88] sm:$0xff]
        %v1655 = vld [vmem:[#allocation2 + $0x90] sm:$0xff]
        %v1656 = vld [vmem:[#allocation2 + $0x98] sm:$0xff]
        %v1661 = vunpack.c.l.b16 %v1633
        %v1662 = vunpack.c.h.b16 %v1633
        %v1663 = vunpack.c.l.b16 %v1634
        %v1664 = vunpack.c.h.b16 %v1634
        %v1665 = vunpack.c.l.b16 %v1635
        %v1666 = vunpack.c.h.b16 %v1635
        %v1667 = vunpack.c.l.b16 %v1636
        %v1668 = vunpack.c.h.b16 %v1636
        %v1669 = vpack.c.b16 %v1663, %v1661
        %v1670 = vpack.c.b16 %v1664, %v1662
        %v1671 = vpack.c.b16 %v1667, %v1665
        %v1672 = vpack.c.b16 %v1668, %v1666
        %v1695 = vunpack.c.l.b16 %v1637
        %v1696 = vunpack.c.h.b16 %v1637
        %v1697 = vunpack.c.l.b16 %v1638
        %v1698 = vunpack.c.h.b16 %v1638
        %v1699 = vunpack.c.l.b16 %v1639
        %v1700 = vunpack.c.h.b16 %v1639
        %v1701 = vunpack.c.l.b16 %v1640
        %v1702 = vunpack.c.h.b16 %v1640
        %v1703 = vunpack.c.l.b16 %v1641
        %v1704 = vunpack.c.h.b16 %v1641
        %v1705 = vunpack.c.l.b16 %v1642
        %v1706 = vunpack.c.h.b16 %v1642
        %v1707 = vunpack.c.l.b16 %v1643
        %v1708 = vunpack.c.h.b16 %v1643
        %v1709 = vunpack.c.l.b16 %v1644
        %v1710 = vunpack.c.h.b16 %v1644
        %v1711 = vunpack.c.l.b16 %v1645
        %v1712 = vunpack.c.h.b16 %v1645
        %v1713 = vunpack.c.l.b16 %v1646
        %v1714 = vunpack.c.h.b16 %v1646
        %v1715 = vunpack.c.l.b16 %v1647
        %v1716 = vunpack.c.h.b16 %v1647
        %v1717 = vunpack.c.l.b16 %v1648
        %v1718 = vunpack.c.h.b16 %v1648
        %v1719 = vunpack.c.l.b16 %v1649
        %v1720 = vunpack.c.h.b16 %v1649
        %v1721 = vunpack.c.l.b16 %v1650
        %v1722 = vunpack.c.h.b16 %v1650
        %v1723 = vunpack.c.l.b16 %v1651
        %v1724 = vunpack.c.h.b16 %v1651
        %v1725 = vunpack.c.l.b16 %v1652
        %v1726 = vunpack.c.h.b16 %v1652
        %v1727 = vunpack.c.l.b16 %v1653
        %v1728 = vunpack.c.h.b16 %v1653
        %v1729 = vunpack.c.l.b16 %v1654
        %v1730 = vunpack.c.h.b16 %v1654
        %v1731 = vunpack.c.l.b16 %v1655
        %v1732 = vunpack.c.h.b16 %v1655
        %v1733 = vunpack.c.l.b16 %v1656
        %v1734 = vunpack.c.h.b16 %v1656
        %v1735 = vpack.c.b16 %v1697, %v1695
        %v1736 = vpack.c.b16 %v1698, %v1696
        %v1737 = vpack.c.b16 %v1701, %v1699
        %v1738 = vpack.c.b16 %v1702, %v1700
        %v1739 = vpack.c.b16 %v1705, %v1703
        %v1740 = vpack.c.b16 %v1706, %v1704
        %v1741 = vpack.c.b16 %v1709, %v1707
        %v1742 = vpack.c.b16 %v1710, %v1708
        %v1743 = vpack.c.b16 %v1713, %v1711
        %v1744 = vpack.c.b16 %v1714, %v1712
        %v1745 = vpack.c.b16 %v1717, %v1715
        %v1746 = vpack.c.b16 %v1718, %v1716
        %v1747 = vpack.c.b16 %v1721, %v1719
        %v1748 = vpack.c.b16 %v1722, %v1720
        %v1749 = vpack.c.b16 %v1725, %v1723
        %v1750 = vpack.c.b16 %v1726, %v1724
        %v1751 = vpack.c.b16 %v1729, %v1727
        %v1752 = vpack.c.b16 %v1730, %v1728
        %v1753 = vpack.c.b16 %v1733, %v1731
        %v1754 = vpack.c.b16 %v1734, %v1732
        %v1776 = vsel %vm980, %v1670, 0
        %v1779 = vsel %vm980, %v1672, 0
        %1781 = vmatprep.subr.bf16.mxu0 %v1750
        %1782 = vmatpush1.bf16.msra.mxu0 %v1749
        %1783 = vmatprep.subr.bf16.mxu0 %v1748
        %1784 = vmatpush1.bf16.msra.mxu0 %v1747
        %1785 = vmatprep.subr.bf16.mxu0 %v1746
        %1786 = vmatpush1.bf16.msra.mxu0 %v1745
        %1787 = vmatprep.subr.bf16.mxu0 %v1744
        %1788 = vmatpush1.bf16.msra.mxu0 %v1743
        %1789 = vmatprep.subr.bf16.mxu0 %v1742
        %1790 = vmatpush1.bf16.msra.mxu0 %v1741
        %1791 = vmatprep.subr.bf16.mxu0 %v1740
        %1792 = vmatpush1.bf16.msra.mxu0 %v1739
        %1793 = vmatprep.subr.bf16.mxu0 %v1738
        %1794 = vmatpush1.bf16.msra.mxu0 %v1737
        %1795 = vmatprep.subr.bf16.mxu0 %v1736
        %1796 = vmatpush1.bf16.msra.mxu0 %v1735
        %1797 = vmatprep.subr.bf16.mxu0 0
        %1798 = vmatpush2.bf16.msra.mxu0 0
        %1799 = vmatprep.subr.bf16.mxu0 0
        %1800 = vmatpush2.bf16.msra.mxu0 0
        %1801 = vmatprep.subr.bf16.mxu0 0
        %1802 = vmatpush2.bf16.msra.mxu0 0
        %1803 = vmatprep.subr.bf16.mxu0 0
        %1804 = vmatpush2.bf16.msra.mxu0 0
        %1805 = vmatprep.subr.bf16.mxu0 0
        %1806 = vmatpush2.bf16.msra.mxu0 0
        %1807 = vmatprep.subr.bf16.mxu0 0
        %1808 = vmatpush2.bf16.msra.mxu0 0
        %1809 = vmatprep.subr.bf16.mxu0 %v1754
        %1810 = vmatpush2.bf16.msra.mxu0 %v1753
        %1811 = vmatprep.subr.bf16.mxu0 %v1752
        %1812 = vmatpush2.bf16.msra.mxu0 %v1751
        %1813 = vmatprep.mubr.bf16.mxu0 %v1776
        %1814 = vmatmul.mubr.bf16.gmra.mxu0 %v1669
        %v1815 = vpop.f32.mrf.mxu0
        %v1816 = vadd.f32 0.0, %v1815
        %v1817 = vpop.f32.mrf.mxu0
        %v1818 = vadd.f32 0.0, %v1817
        %v1819 = vpop.f32.mrf.mxu0
        %v1820 = vadd.f32 0.0, %v1819
        %v1821 = vpop.f32.mrf.mxu0
        %v1822 = vadd.f32 0.0, %v1821
        %1823 = vmatprep.mubr.bf16.mxu0 %v1779
        %1824 = vmatmul.mubr.bf16.gmra.mxu0 %v1671
        %v1825 = vpop.f32.mrf.mxu0
        %v1826 = vadd.f32 0.0, %v1825
        %v1827 = vpop.f32.mrf.mxu0
        %v1828 = vadd.f32 0.0, %v1827
        %v1829 = vpop.f32.mrf.mxu0
        %v1830 = vadd.f32 0.0, %v1829
        %v1831 = vpop.f32.mrf.mxu0
        %v1832 = vadd.f32 0.0, %v1831
        %1833 = vdwg.mxu0
        %v1834 = vld [vmem:[#allocation15] sm:$0xff]
        %v1835 = vld [vmem:[#allocation15 + $0x8] sm:$0xff]
        %v1836 = vld [vmem:[#allocation15 + $0x10] sm:$0xff]
        %v1837 = vld [vmem:[#allocation15 + $0x18] sm:$0xff]
        %1839 = vset.pattern.permute.xlu0 0
        %1840 = vperm.xlu0 %1839, %v1834
        %v1841 = vpop.permute.xlu0 %1840
        %1844 = vset.pattern.permute.xlu0 0
        %1845 = vperm.xlu0 %1844, %v1835
        %v1846 = vpop.permute.xlu0 %1845
        %1849 = vset.pattern.permute.xlu0 0
        %1850 = vperm.xlu0 %1849, %v1836
        %v1851 = vpop.permute.xlu0 %1850
        %1854 = vset.pattern.permute.xlu0 0
        %1855 = vperm.xlu0 %1854, %v1837
        %v1856 = vpop.permute.xlu0 %1855
        %v1858 = vmul.f32 %v1816, %v1841
        %v1859 = vmul.f32 %v1818, %v1841
        %v1860 = vmul.f32 %v1820, %v1846
        %v1861 = vmul.f32 %v1822, %v1846
        %v1862 = vmul.f32 %v1826, %v1851
        %v1863 = vmul.f32 %v1828, %v1851
        %v1864 = vmul.f32 %v1830, %v1856
        %v1865 = vmul.f32 %v1832, %v1856
        %v1866 = vld [vmem:[#allocation17] sm:$0xff]
        %v1867 = vld [vmem:[#allocation17 + $0x8] sm:$0xff]
        %v1868 = vld [vmem:[#allocation17 + $0x10] sm:$0xff]
        %v1869 = vld [vmem:[#allocation17 + $0x18] sm:$0xff]
        %1871 = vset.pattern.permute.xlu0 0
        %1872 = vperm.xlu0 %1871, %v1866
        %v1873 = vpop.permute.xlu0 %1872
        %1876 = vset.pattern.permute.xlu0 0
        %1877 = vperm.xlu0 %1876, %v1867
        %v1878 = vpop.permute.xlu0 %1877
        %1881 = vset.pattern.permute.xlu0 0
        %1882 = vperm.xlu0 %1881, %v1868
        %v1883 = vpop.permute.xlu0 %1882
        %1886 = vset.pattern.permute.xlu0 0
        %1887 = vperm.xlu0 %1886, %v1869
        %v1888 = vpop.permute.xlu0 %1887
        %v1890 = vadd.f32 %v1858, %v1873
        %v1891 = vadd.f32 %v1859, %v1873
        %v1892 = vadd.f32 %v1860, %v1878
        %v1893 = vadd.f32 %v1861, %v1878
        %v1894 = vadd.f32 %v1862, %v1883
        %v1895 = vadd.f32 %v1863, %v1883
        %v1896 = vadd.f32 %v1864, %v1888
        %v1897 = vadd.f32 %v1865, %v1888
        %v1898 = vadd.f32 %v1890, %v1104
        %v1899 = vadd.f32 %v1891, %v1105
        %v1900 = vadd.f32 %v1892, %v1106
        %v1901 = vadd.f32 %v1893, %v1107
        %v1902 = vadd.f32 %v1894, %v1108
        %v1903 = vadd.f32 %v1895, %v1109
        %v1904 = vadd.f32 %v1896, %v1110
        %v1905 = vadd.f32 %v1897, %v1111
        %v1906 = vmax.f32 %v1898, 0.0
        %v1907 = vmax.f32 %v1899, 0.0
        %v1908 = vmax.f32 %v1900, 0.0
        %v1909 = vmax.f32 %v1901, 0.0
        %v1910 = vmax.f32 %v1902, 0.0
        %v1911 = vmax.f32 %v1903, 0.0
        %v1912 = vmax.f32 %v1904, 0.0
        %v1913 = vmax.f32 %v1905, 0.0
        %v1914 = vpack.c.bf16 %v1908, %v1906
        %v1915 = vpack.c.bf16 %v1909, %v1907
        %v1916 = vpack.c.bf16 %v1912, %v1910
        %v1917 = vpack.c.bf16 %v1913, %v1911
        %v1922 = vunpack.c.l.b16 %v1914
        %v1923 = vunpack.c.l.b16 %v1915
        %v1924 = vunpack.c.h.b16 %v1914
        %v1925 = vunpack.c.h.b16 %v1915
        %v1926 = vunpack.c.l.b16 %v1916
        %v1927 = vunpack.c.l.b16 %v1917
        %v1928 = vunpack.c.h.b16 %v1916
        %v1929 = vunpack.c.h.b16 %v1917
        %v1930 = vpack.c.b16 %v1923, %v1922
        %v1931 = vpack.c.b16 %v1925, %v1924
        %v1932 = vpack.c.b16 %v1927, %v1926
        %v1933 = vpack.c.b16 %v1929, %v1928
        %1934 = vrot.lane.b32.xlu0 %v1930, 2
        %v1935 = vpop.permute.xlu0 %1934
        %1936 = vrot.lane.b32.xlu0 %v1931, 2
        %v1937 = vpop.permute.xlu0 %1936
        %1938 = vrot.lane.b32.xlu0 %v1932, 2
        %v1939 = vpop.permute.xlu0 %1938
        %1940 = vrot.lane.b32.xlu0 %v1933, 2
        %v1941 = vpop.permute.xlu0 %1940
        %v1942 = vrot.slane %v1935, 4
        %v1943 = vrot.slane %v1937, 4
        %v1944 = vrot.slane %v1939, 4
        %v1945 = vrot.slane %v1941, 4
        %v1946 = vsel %vm736, %v1942, %v1935
        %v1947 = vsel %vm736, %v1943, %v1937
        %v1948 = vsel %vm736, %v1944, %v1939
        %v1949 = vsel %vm736, %v1945, %v1941
        %1954 = vst.msk [vmem:[#allocation2] sm:$0xff] %vm747, %v1946
        %1955 = vst.msk [vmem:[#allocation2 + $0x8] sm:$0xff] %vm747, %v1947
        %1956 = vst.msk [vmem:[#allocation2 + $0x10] sm:$0xff] %vm747, %v1948
        %1957 = vst.msk [vmem:[#allocation2 + $0x18] sm:$0xff] %vm747, %v1949
        %1958 = vrot.lane.b32.xlu0 %v1930, 1
        %v1959 = vpop.permute.xlu0 %1958
        %1960 = vrot.lane.b32.xlu0 %v1931, 1
        %v1961 = vpop.permute.xlu0 %1960
        %1962 = vrot.lane.b32.xlu0 %v1932, 1
        %v1963 = vpop.permute.xlu0 %1962
        %1964 = vrot.lane.b32.xlu0 %v1933, 1
        %v1965 = vpop.permute.xlu0 %1964
        %v1966 = vrot.slane %v1959, 4
        %v1967 = vrot.slane %v1961, 4
        %v1968 = vrot.slane %v1963, 4
        %v1969 = vrot.slane %v1965, 4
        %v1970 = vsel %vm764, %v1966, %v1959
        %v1971 = vsel %vm764, %v1967, %v1961
        %v1972 = vsel %vm764, %v1968, %v1963
        %v1973 = vsel %vm764, %v1969, %v1965
        %1978 = vst.msk [vmem:[#allocation2 + $0x20] sm:$0xff] %vm774, %v1970
        %1979 = vst.msk [vmem:[#allocation2 + $0x28] sm:$0xff] %vm774, %v1971
        %1980 = vst.msk [vmem:[#allocation2 + $0x30] sm:$0xff] %vm774, %v1972
        %1981 = vst.msk [vmem:[#allocation2 + $0x38] sm:$0xff] %vm774, %v1973
        %1986 = vst [vmem:[#allocation2 + $0x40] sm:$0xff] %v1930
        %1987 = vst [vmem:[#allocation2 + $0x48] sm:$0xff] %v1931
        %1988 = vst [vmem:[#allocation2 + $0x50] sm:$0xff] %v1932
        %1989 = vst [vmem:[#allocation2 + $0x58] sm:$0xff] %v1933
        %1990 = vrot.lane.b32.xlu0 %v1930, 127
        %v1991 = vpop.permute.xlu0 %1990
        %1992 = vrot.lane.b32.xlu0 %v1931, 127
        %v1993 = vpop.permute.xlu0 %1992
        %1994 = vrot.lane.b32.xlu0 %v1932, 127
        %v1995 = vpop.permute.xlu0 %1994
        %1996 = vrot.lane.b32.xlu0 %v1933, 127
        %v1997 = vpop.permute.xlu0 %1996
        %v1998 = vrot.slane %v1991, 4
        %v1999 = vrot.slane %v1993, 4
        %v2000 = vrot.slane %v1995, 4
        %v2001 = vrot.slane %v1997, 4
        %v2002 = vsel %vm795, %v1991, %v1998
        %v2003 = vsel %vm795, %v1993, %v1999
        %v2004 = vsel %vm795, %v1995, %v2000
        %v2005 = vsel %vm795, %v1997, %v2001
        %2010 = vst.msk [vmem:[#allocation2 + $0x60] sm:$0xff] %vm806, %v2002
        %2011 = vst.msk [vmem:[#allocation2 + $0x68] sm:$0xff] %vm806, %v2003
        %2012 = vst.msk [vmem:[#allocation2 + $0x70] sm:$0xff] %vm806, %v2004
        %2013 = vst.msk [vmem:[#allocation2 + $0x78] sm:$0xff] %vm806, %v2005
        %2014 = vrot.lane.b32.xlu0 %v1930, 126
        %v2015 = vpop.permute.xlu0 %2014
        %2016 = vrot.lane.b32.xlu0 %v1931, 126
        %v2017 = vpop.permute.xlu0 %2016
        %2018 = vrot.lane.b32.xlu0 %v1932, 126
        %v2019 = vpop.permute.xlu0 %2018
        %2020 = vrot.lane.b32.xlu0 %v1933, 126
        %v2021 = vpop.permute.xlu0 %2020
        %v2022 = vrot.slane %v2015, 4
        %v2023 = vrot.slane %v2017, 4
        %v2024 = vrot.slane %v2019, 4
        %v2025 = vrot.slane %v2021, 4
        %v2026 = vsel %vm823, %v2015, %v2022
        %v2027 = vsel %vm823, %v2017, %v2023
        %v2028 = vsel %vm823, %v2019, %v2024
        %v2029 = vsel %vm823, %v2021, %v2025
        %2034 = vst.msk [vmem:[#allocation2 + $0x80] sm:$0xff] %vm833, %v2026
        %2035 = vst.msk [vmem:[#allocation2 + $0x88] sm:$0xff] %vm833, %v2027
        %2036 = vst.msk [vmem:[#allocation2 + $0x90] sm:$0xff] %vm833, %v2028
        %2037 = vst.msk [vmem:[#allocation2 + $0x98] sm:$0xff] %vm833, %v2029
        %v2038 = vld [vmem:[#allocation18] sm:$0xff]
        %v2039 = vld [vmem:[#allocation18 + $0x8] sm:$0xff]
        %v2040 = vld [vmem:[#allocation18 + $0x10] sm:$0xff]
        %v2041 = vld [vmem:[#allocation18 + $0x18] sm:$0xff]
        %v2042 = vld [vmem:[#allocation2] sm:$0xff]
        %v2043 = vld [vmem:[#allocation2 + $0x8] sm:$0xff]
        %v2044 = vld [vmem:[#allocation2 + $0x10] sm:$0xff]
        %v2045 = vld [vmem:[#allocation2 + $0x18] sm:$0xff]
        %v2046 = vld [vmem:[#allocation2 + $0x20] sm:$0xff]
        %v2047 = vld [vmem:[#allocation2 + $0x28] sm:$0xff]
        %v2048 = vld [vmem:[#allocation2 + $0x30] sm:$0xff]
        %v2049 = vld [vmem:[#allocation2 + $0x38] sm:$0xff]
        %v2050 = vld [vmem:[#allocation2 + $0x40] sm:$0xff]
        %v2051 = vld [vmem:[#allocation2 + $0x48] sm:$0xff]
        %v2052 = vld [vmem:[#allocation2 + $0x50] sm:$0xff]
        %v2053 = vld [vmem:[#allocation2 + $0x58] sm:$0xff]
        %v2054 = vld [vmem:[#allocation2 + $0x60] sm:$0xff]
        %v2055 = vld [vmem:[#allocation2 + $0x68] sm:$0xff]
        %v2056 = vld [vmem:[#allocation2 + $0x70] sm:$0xff]
        %v2057 = vld [vmem:[#allocation2 + $0x78] sm:$0xff]
        %v2058 = vld [vmem:[#allocation2 + $0x80] sm:$0xff]
        %v2059 = vld [vmem:[#allocation2 + $0x88] sm:$0xff]
        %v2060 = vld [vmem:[#allocation2 + $0x90] sm:$0xff]
        %v2061 = vld [vmem:[#allocation2 + $0x98] sm:$0xff]
        %v2066 = vunpack.c.l.b16 %v2038
        %v2067 = vunpack.c.h.b16 %v2038
        %v2068 = vunpack.c.l.b16 %v2039
        %v2069 = vunpack.c.h.b16 %v2039
        %v2070 = vunpack.c.l.b16 %v2040
        %v2071 = vunpack.c.h.b16 %v2040
        %v2072 = vunpack.c.l.b16 %v2041
        %v2073 = vunpack.c.h.b16 %v2041
        %v2074 = vpack.c.b16 %v2068, %v2066
        %v2075 = vpack.c.b16 %v2069, %v2067
        %v2076 = vpack.c.b16 %v2072, %v2070
        %v2077 = vpack.c.b16 %v2073, %v2071
        %v2100 = vunpack.c.l.b16 %v2042
        %v2101 = vunpack.c.h.b16 %v2042
        %v2102 = vunpack.c.l.b16 %v2043
        %v2103 = vunpack.c.h.b16 %v2043
        %v2104 = vunpack.c.l.b16 %v2044
        %v2105 = vunpack.c.h.b16 %v2044
        %v2106 = vunpack.c.l.b16 %v2045
        %v2107 = vunpack.c.h.b16 %v2045
        %v2108 = vunpack.c.l.b16 %v2046
        %v2109 = vunpack.c.h.b16 %v2046
        %v2110 = vunpack.c.l.b16 %v2047
        %v2111 = vunpack.c.h.b16 %v2047
        %v2112 = vunpack.c.l.b16 %v2048
        %v2113 = vunpack.c.h.b16 %v2048
        %v2114 = vunpack.c.l.b16 %v2049
        %v2115 = vunpack.c.h.b16 %v2049
        %v2116 = vunpack.c.l.b16 %v2050
        %v2117 = vunpack.c.h.b16 %v2050
        %v2118 = vunpack.c.l.b16 %v2051
        %v2119 = vunpack.c.h.b16 %v2051
        %v2120 = vunpack.c.l.b16 %v2052
        %v2121 = vunpack.c.h.b16 %v2052
        %v2122 = vunpack.c.l.b16 %v2053
        %v2123 = vunpack.c.h.b16 %v2053
        %v2124 = vunpack.c.l.b16 %v2054
        %v2125 = vunpack.c.h.b16 %v2054
        %v2126 = vunpack.c.l.b16 %v2055
        %v2127 = vunpack.c.h.b16 %v2055
        %v2128 = vunpack.c.l.b16 %v2056
        %v2129 = vunpack.c.h.b16 %v2056
        %v2130 = vunpack.c.l.b16 %v2057
        %v2131 = vunpack.c.h.b16 %v2057
        %v2132 = vunpack.c.l.b16 %v2058
        %v2133 = vunpack.c.h.b16 %v2058
        %v2134 = vunpack.c.l.b16 %v2059
        %v2135 = vunpack.c.h.b16 %v2059
        %v2136 = vunpack.c.l.b16 %v2060
        %v2137 = vunpack.c.h.b16 %v2060
        %v2138 = vunpack.c.l.b16 %v2061
        %v2139 = vunpack.c.h.b16 %v2061
        %v2140 = vpack.c.b16 %v2102, %v2100
        %v2141 = vpack.c.b16 %v2103, %v2101
        %v2142 = vpack.c.b16 %v2106, %v2104
        %v2143 = vpack.c.b16 %v2107, %v2105
        %v2144 = vpack.c.b16 %v2110, %v2108
        %v2145 = vpack.c.b16 %v2111, %v2109
        %v2146 = vpack.c.b16 %v2114, %v2112
        %v2147 = vpack.c.b16 %v2115, %v2113
        %v2148 = vpack.c.b16 %v2118, %v2116
        %v2149 = vpack.c.b16 %v2119, %v2117
        %v2150 = vpack.c.b16 %v2122, %v2120
        %v2151 = vpack.c.b16 %v2123, %v2121
        %v2152 = vpack.c.b16 %v2126, %v2124
        %v2153 = vpack.c.b16 %v2127, %v2125
        %v2154 = vpack.c.b16 %v2130, %v2128
        %v2155 = vpack.c.b16 %v2131, %v2129
        %v2156 = vpack.c.b16 %v2134, %v2132
        %v2157 = vpack.c.b16 %v2135, %v2133
        %v2158 = vpack.c.b16 %v2138, %v2136
        %v2159 = vpack.c.b16 %v2139, %v2137
        %v2181 = vsel %vm980, %v2075, 0
        %v2184 = vsel %vm980, %v2077, 0
        %2186 = vmatprep.subr.bf16.mxu0 %v2155
        %2187 = vmatpush1.bf16.msra.mxu0 %v2154
        %2188 = vmatprep.subr.bf16.mxu0 %v2153
        %2189 = vmatpush1.bf16.msra.mxu0 %v2152
        %2190 = vmatprep.subr.bf16.mxu0 %v2151
        %2191 = vmatpush1.bf16.msra.mxu0 %v2150
        %2192 = vmatprep.subr.bf16.mxu0 %v2149
        %2193 = vmatpush1.bf16.msra.mxu0 %v2148
        %2194 = vmatprep.subr.bf16.mxu0 %v2147
        %2195 = vmatpush1.bf16.msra.mxu0 %v2146
        %2196 = vmatprep.subr.bf16.mxu0 %v2145
        %2197 = vmatpush1.bf16.msra.mxu0 %v2144
        %2198 = vmatprep.subr.bf16.mxu0 %v2143
        %2199 = vmatpush1.bf16.msra.mxu0 %v2142
        %2200 = vmatprep.subr.bf16.mxu0 %v2141
        %2201 = vmatpush1.bf16.msra.mxu0 %v2140
        %2202 = vmatprep.subr.bf16.mxu0 0
        %2203 = vmatpush2.bf16.msra.mxu0 0
        %2204 = vmatprep.subr.bf16.mxu0 0
        %2205 = vmatpush2.bf16.msra.mxu0 0
        %2206 = vmatprep.subr.bf16.mxu0 0
        %2207 = vmatpush2.bf16.msra.mxu0 0
        %2208 = vmatprep.subr.bf16.mxu0 0
        %2209 = vmatpush2.bf16.msra.mxu0 0
        %2210 = vmatprep.subr.bf16.mxu0 0
        %2211 = vmatpush2.bf16.msra.mxu0 0
        %2212 = vmatprep.subr.bf16.mxu0 0
        %2213 = vmatpush2.bf16.msra.mxu0 0
        %2214 = vmatprep.subr.bf16.mxu0 %v2159
        %2215 = vmatpush2.bf16.msra.mxu0 %v2158
        %2216 = vmatprep.subr.bf16.mxu0 %v2157
        %2217 = vmatpush2.bf16.msra.mxu0 %v2156
        %2218 = vmatprep.mubr.bf16.mxu0 %v2181
        %2219 = vmatmul.mubr.bf16.gmra.mxu0 %v2074
        %v2220 = vpop.f32.mrf.mxu0
        %v2221 = vadd.f32 0.0, %v2220
        %v2222 = vpop.f32.mrf.mxu0
        %v2223 = vadd.f32 0.0, %v2222
        %v2224 = vpop.f32.mrf.mxu0
        %v2225 = vadd.f32 0.0, %v2224
        %v2226 = vpop.f32.mrf.mxu0
        %v2227 = vadd.f32 0.0, %v2226
        %2228 = vmatprep.mubr.bf16.mxu0 %v2184
        %2229 = vmatmul.mubr.bf16.gmra.mxu0 %v2076
        %v2230 = vpop.f32.mrf.mxu0
        %v2231 = vadd.f32 0.0, %v2230
        %v2232 = vpop.f32.mrf.mxu0
        %v2233 = vadd.f32 0.0, %v2232
        %v2234 = vpop.f32.mrf.mxu0
        %v2235 = vadd.f32 0.0, %v2234
        %v2236 = vpop.f32.mrf.mxu0
        %v2237 = vadd.f32 0.0, %v2236
        %2238 = vdwg.mxu0
        %v2239 = vld [vmem:[#allocation20] sm:$0xff]
        %v2240 = vld [vmem:[#allocation20 + $0x8] sm:$0xff]
        %v2241 = vld [vmem:[#allocation20 + $0x10] sm:$0xff]
        %v2242 = vld [vmem:[#allocation20 + $0x18] sm:$0xff]
        %2244 = vset.pattern.permute.xlu0 0
        %2245 = vperm.xlu0 %2244, %v2239
        %v2246 = vpop.permute.xlu0 %2245
        %2249 = vset.pattern.permute.xlu0 0
        %2250 = vperm.xlu0 %2249, %v2240
        %v2251 = vpop.permute.xlu0 %2250
        %2254 = vset.pattern.permute.xlu0 0
        %2255 = vperm.xlu0 %2254, %v2241
        %v2256 = vpop.permute.xlu0 %2255
        %2259 = vset.pattern.permute.xlu0 0
        %2260 = vperm.xlu0 %2259, %v2242
        %v2261 = vpop.permute.xlu0 %2260
        %v2263 = vmul.f32 %v2221, %v2246
        %v2264 = vmul.f32 %v2223, %v2246
        %v2265 = vmul.f32 %v2225, %v2251
        %v2266 = vmul.f32 %v2227, %v2251
        %v2267 = vmul.f32 %v2231, %v2256
        %v2268 = vmul.f32 %v2233, %v2256
        %v2269 = vmul.f32 %v2235, %v2261
        %v2270 = vmul.f32 %v2237, %v2261
        %v2271 = vld [vmem:[%s12] sm:$0xff]
        %v2272 = vld [vmem:[%s12 + $0x8] sm:$0xff]
        %v2273 = vld [vmem:[%s12 + $0x10] sm:$0xff]
        %v2274 = vld [vmem:[%s12 + $0x18] sm:$0xff]
        %2276 = vset.pattern.permute.xlu0 0
        %2277 = vperm.xlu0 %2276, %v2271
        %v2278 = vpop.permute.xlu0 %2277
        %2281 = vset.pattern.permute.xlu0 0
        %2282 = vperm.xlu0 %2281, %v2272
        %v2283 = vpop.permute.xlu0 %2282
        %2286 = vset.pattern.permute.xlu0 0
        %2287 = vperm.xlu0 %2286, %v2273
        %v2288 = vpop.permute.xlu0 %2287
        %2291 = vset.pattern.permute.xlu0 0
        %2292 = vperm.xlu0 %2291, %v2274
        %v2293 = vpop.permute.xlu0 %2292
        %v2295 = vadd.f32 %v2263, %v2278
        %v2296 = vadd.f32 %v2264, %v2278
        %v2297 = vadd.f32 %v2265, %v2283
        %v2298 = vadd.f32 %v2266, %v2283
        %v2299 = vadd.f32 %v2267, %v2288
        %v2300 = vadd.f32 %v2268, %v2288
        %v2301 = vadd.f32 %v2269, %v2293
        %v2302 = vadd.f32 %v2270, %v2293
        %v2303 = vmax.f32 %v2295, 0.0
        %v2304 = vmax.f32 %v2296, 0.0
        %v2305 = vmax.f32 %v2297, 0.0
        %v2306 = vmax.f32 %v2298, 0.0
        %v2307 = vmax.f32 %v2299, 0.0
        %v2308 = vmax.f32 %v2300, 0.0
        %v2309 = vmax.f32 %v2301, 0.0
        %v2310 = vmax.f32 %v2302, 0.0
        %v2311 = vpack.c.bf16 %v2305, %v2303
        %v2312 = vpack.c.bf16 %v2306, %v2304
        %v2313 = vpack.c.bf16 %v2309, %v2307
        %v2314 = vpack.c.bf16 %v2310, %v2308
        %v2319 = vunpack.c.l.b16 %v2311
        %v2320 = vunpack.c.l.b16 %v2312
        %v2321 = vunpack.c.h.b16 %v2311
        %v2322 = vunpack.c.h.b16 %v2312
        %v2323 = vunpack.c.l.b16 %v2313
        %v2324 = vunpack.c.l.b16 %v2314
        %v2325 = vunpack.c.h.b16 %v2313
        %v2326 = vunpack.c.h.b16 %v2314
        %v2327 = vpack.c.b16 %v2320, %v2319
        %v2328 = vpack.c.b16 %v2322, %v2321
        %v2329 = vpack.c.b16 %v2324, %v2323
        %v2330 = vpack.c.b16 %v2326, %v2325
        %2331 = vrot.lane.b32.xlu0 %v2327, 2
        %v2332 = vpop.permute.xlu0 %2331
        %2333 = vrot.lane.b32.xlu0 %v2328, 2
        %v2334 = vpop.permute.xlu0 %2333
        %2335 = vrot.lane.b32.xlu0 %v2329, 2
        %v2336 = vpop.permute.xlu0 %2335
        %2337 = vrot.lane.b32.xlu0 %v2330, 2
        %v2338 = vpop.permute.xlu0 %2337
        %v2339 = vrot.slane %v2332, 4
        %v2340 = vrot.slane %v2334, 4
        %v2341 = vrot.slane %v2336, 4
        %v2342 = vrot.slane %v2338, 4
        %v2343 = vsel %vm736, %v2339, %v2332
        %v2344 = vsel %vm736, %v2340, %v2334
        %v2345 = vsel %vm736, %v2341, %v2336
        %v2346 = vsel %vm736, %v2342, %v2338
        %2351 = vst.msk [vmem:[#allocation2] sm:$0xff] %vm747, %v2343
        %2352 = vst.msk [vmem:[#allocation2 + $0x8] sm:$0xff] %vm747, %v2344
        %2353 = vst.msk [vmem:[#allocation2 + $0x10] sm:$0xff] %vm747, %v2345
        %2354 = vst.msk [vmem:[#allocation2 + $0x18] sm:$0xff] %vm747, %v2346
        %2355 = vrot.lane.b32.xlu0 %v2327, 1
        %v2356 = vpop.permute.xlu0 %2355
        %2357 = vrot.lane.b32.xlu0 %v2328, 1
        %v2358 = vpop.permute.xlu0 %2357
        %2359 = vrot.lane.b32.xlu0 %v2329, 1
        %v2360 = vpop.permute.xlu0 %2359
        %2361 = vrot.lane.b32.xlu0 %v2330, 1
        %v2362 = vpop.permute.xlu0 %2361
        %v2363 = vrot.slane %v2356, 4
        %v2364 = vrot.slane %v2358, 4
        %v2365 = vrot.slane %v2360, 4
        %v2366 = vrot.slane %v2362, 4
        %v2367 = vsel %vm764, %v2363, %v2356
        %v2368 = vsel %vm764, %v2364, %v2358
        %v2369 = vsel %vm764, %v2365, %v2360
        %v2370 = vsel %vm764, %v2366, %v2362
        %2375 = vst.msk [vmem:[#allocation2 + $0x20] sm:$0xff] %vm774, %v2367
        %2376 = vst.msk [vmem:[#allocation2 + $0x28] sm:$0xff] %vm774, %v2368
        %2377 = vst.msk [vmem:[#allocation2 + $0x30] sm:$0xff] %vm774, %v2369
        %2378 = vst.msk [vmem:[#allocation2 + $0x38] sm:$0xff] %vm774, %v2370
        %2383 = vst [vmem:[#allocation2 + $0x40] sm:$0xff] %v2327
        %2384 = vst [vmem:[#allocation2 + $0x48] sm:$0xff] %v2328
        %2385 = vst [vmem:[#allocation2 + $0x50] sm:$0xff] %v2329
        %2386 = vst [vmem:[#allocation2 + $0x58] sm:$0xff] %v2330
        %2387 = vrot.lane.b32.xlu0 %v2327, 127
        %v2388 = vpop.permute.xlu0 %2387
        %2389 = vrot.lane.b32.xlu0 %v2328, 127
        %v2390 = vpop.permute.xlu0 %2389
        %2391 = vrot.lane.b32.xlu0 %v2329, 127
        %v2392 = vpop.permute.xlu0 %2391
        %2393 = vrot.lane.b32.xlu0 %v2330, 127
        %v2394 = vpop.permute.xlu0 %2393
        %v2395 = vrot.slane %v2388, 4
        %v2396 = vrot.slane %v2390, 4
        %v2397 = vrot.slane %v2392, 4
        %v2398 = vrot.slane %v2394, 4
        %v2399 = vsel %vm795, %v2388, %v2395
        %v2400 = vsel %vm795, %v2390, %v2396
        %v2401 = vsel %vm795, %v2392, %v2397
        %v2402 = vsel %vm795, %v2394, %v2398
        %2407 = vst.msk [vmem:[#allocation2 + $0x60] sm:$0xff] %vm806, %v2399
        %2408 = vst.msk [vmem:[#allocation2 + $0x68] sm:$0xff] %vm806, %v2400
        %2409 = vst.msk [vmem:[#allocation2 + $0x70] sm:$0xff] %vm806, %v2401
        %2410 = vst.msk [vmem:[#allocation2 + $0x78] sm:$0xff] %vm806, %v2402
        %2411 = vrot.lane.b32.xlu0 %v2327, 126
        %v2412 = vpop.permute.xlu0 %2411
        %2413 = vrot.lane.b32.xlu0 %v2328, 126
        %v2414 = vpop.permute.xlu0 %2413
        %2415 = vrot.lane.b32.xlu0 %v2329, 126
        %v2416 = vpop.permute.xlu0 %2415
        %2417 = vrot.lane.b32.xlu0 %v2330, 126
        %v2418 = vpop.permute.xlu0 %2417
        %v2419 = vrot.slane %v2412, 4
        %v2420 = vrot.slane %v2414, 4
        %v2421 = vrot.slane %v2416, 4
        %v2422 = vrot.slane %v2418, 4
        %v2423 = vsel %vm823, %v2412, %v2419
        %v2424 = vsel %vm823, %v2414, %v2420
        %v2425 = vsel %vm823, %v2416, %v2421
        %v2426 = vsel %vm823, %v2418, %v2422
        %2431 = vst.msk [vmem:[#allocation2 + $0x80] sm:$0xff] %vm833, %v2423
        %2432 = vst.msk [vmem:[#allocation2 + $0x88] sm:$0xff] %vm833, %v2424
        %2433 = vst.msk [vmem:[#allocation2 + $0x90] sm:$0xff] %vm833, %v2425
        %2434 = vst.msk [vmem:[#allocation2 + $0x98] sm:$0xff] %vm833, %v2426
        %v2435 = vld [vmem:[#allocation21] sm:$0xff]
        %v2436 = vld [vmem:[#allocation21 + $0x8] sm:$0xff]
        %v2437 = vld [vmem:[#allocation21 + $0x10] sm:$0xff]
        %v2438 = vld [vmem:[#allocation21 + $0x18] sm:$0xff]
        %v2439 = vld [vmem:[#allocation2] sm:$0xff]
        %v2440 = vld [vmem:[#allocation2 + $0x8] sm:$0xff]
        %v2441 = vld [vmem:[#allocation2 + $0x10] sm:$0xff]
        %v2442 = vld [vmem:[#allocation2 + $0x18] sm:$0xff]
        %v2443 = vld [vmem:[#allocation2 + $0x20] sm:$0xff]
        %v2444 = vld [vmem:[#allocation2 + $0x28] sm:$0xff]
        %v2445 = vld [vmem:[#allocation2 + $0x30] sm:$0xff]
        %v2446 = vld [vmem:[#allocation2 + $0x38] sm:$0xff]
        %v2447 = vld [vmem:[#allocation2 + $0x40] sm:$0xff]
        %v2448 = vld [vmem:[#allocation2 + $0x48] sm:$0xff]
        %v2449 = vld [vmem:[#allocation2 + $0x50] sm:$0xff]
        %v2450 = vld [vmem:[#allocation2 + $0x58] sm:$0xff]
        %v2451 = vld [vmem:[#allocation2 + $0x60] sm:$0xff]
        %v2452 = vld [vmem:[#allocation2 + $0x68] sm:$0xff]
        %v2453 = vld [vmem:[#allocation2 + $0x70] sm:$0xff]
        %v2454 = vld [vmem:[#allocation2 + $0x78] sm:$0xff]
        %v2455 = vld [vmem:[#allocation2 + $0x80] sm:$0xff]
        %v2456 = vld [vmem:[#allocation2 + $0x88] sm:$0xff]
        %v2457 = vld [vmem:[#allocation2 + $0x90] sm:$0xff]
        %v2458 = vld [vmem:[#allocation2 + $0x98] sm:$0xff]
        %v2463 = vunpack.c.l.b16 %v2435
        %v2464 = vunpack.c.h.b16 %v2435
        %v2465 = vunpack.c.l.b16 %v2436
        %v2466 = vunpack.c.h.b16 %v2436
        %v2467 = vunpack.c.l.b16 %v2437
        %v2468 = vunpack.c.h.b16 %v2437
        %v2469 = vunpack.c.l.b16 %v2438
        %v2470 = vunpack.c.h.b16 %v2438
        %v2471 = vpack.c.b16 %v2465, %v2463
        %v2472 = vpack.c.b16 %v2466, %v2464
        %v2473 = vpack.c.b16 %v2469, %v2467
        %v2474 = vpack.c.b16 %v2470, %v2468
        %v2497 = vunpack.c.l.b16 %v2439
        %v2498 = vunpack.c.h.b16 %v2439
        %v2499 = vunpack.c.l.b16 %v2440
        %v2500 = vunpack.c.h.b16 %v2440
        %v2501 = vunpack.c.l.b16 %v2441
        %v2502 = vunpack.c.h.b16 %v2441
        %v2503 = vunpack.c.l.b16 %v2442
        %v2504 = vunpack.c.h.b16 %v2442
        %v2505 = vunpack.c.l.b16 %v2443
        %v2506 = vunpack.c.h.b16 %v2443
        %v2507 = vunpack.c.l.b16 %v2444
        %v2508 = vunpack.c.h.b16 %v2444
        %v2509 = vunpack.c.l.b16 %v2445
        %v2510 = vunpack.c.h.b16 %v2445
        %v2511 = vunpack.c.l.b16 %v2446
        %v2512 = vunpack.c.h.b16 %v2446
        %v2513 = vunpack.c.l.b16 %v2447
        %v2514 = vunpack.c.h.b16 %v2447
        %v2515 = vunpack.c.l.b16 %v2448
        %v2516 = vunpack.c.h.b16 %v2448
        %v2517 = vunpack.c.l.b16 %v2449
        %v2518 = vunpack.c.h.b16 %v2449
        %v2519 = vunpack.c.l.b16 %v2450
        %v2520 = vunpack.c.h.b16 %v2450
        %v2521 = vunpack.c.l.b16 %v2451
        %v2522 = vunpack.c.h.b16 %v2451
        %v2523 = vunpack.c.l.b16 %v2452
        %v2524 = vunpack.c.h.b16 %v2452
        %v2525 = vunpack.c.l.b16 %v2453
        %v2526 = vunpack.c.h.b16 %v2453
        %v2527 = vunpack.c.l.b16 %v2454
        %v2528 = vunpack.c.h.b16 %v2454
        %v2529 = vunpack.c.l.b16 %v2455
        %v2530 = vunpack.c.h.b16 %v2455
        %v2531 = vunpack.c.l.b16 %v2456
        %v2532 = vunpack.c.h.b16 %v2456
        %v2533 = vunpack.c.l.b16 %v2457
        %v2534 = vunpack.c.h.b16 %v2457
        %v2535 = vunpack.c.l.b16 %v2458
        %v2536 = vunpack.c.h.b16 %v2458
        %v2537 = vpack.c.b16 %v2499, %v2497
        %v2538 = vpack.c.b16 %v2500, %v2498
        %v2539 = vpack.c.b16 %v2503, %v2501
        %v2540 = vpack.c.b16 %v2504, %v2502
        %v2541 = vpack.c.b16 %v2507, %v2505
        %v2542 = vpack.c.b16 %v2508, %v2506
        %v2543 = vpack.c.b16 %v2511, %v2509
        %v2544 = vpack.c.b16 %v2512, %v2510
        %v2545 = vpack.c.b16 %v2515, %v2513
        %v2546 = vpack.c.b16 %v2516, %v2514
        %v2547 = vpack.c.b16 %v2519, %v2517
        %v2548 = vpack.c.b16 %v2520, %v2518
        %v2549 = vpack.c.b16 %v2523, %v2521
        %v2550 = vpack.c.b16 %v2524, %v2522
        %v2551 = vpack.c.b16 %v2527, %v2525
        %v2552 = vpack.c.b16 %v2528, %v2526
        %v2553 = vpack.c.b16 %v2531, %v2529
        %v2554 = vpack.c.b16 %v2532, %v2530
        %v2555 = vpack.c.b16 %v2535, %v2533
        %v2556 = vpack.c.b16 %v2536, %v2534
        %v2578 = vsel %vm980, %v2472, 0
        %v2581 = vsel %vm980, %v2474, 0
        %2583 = vmatprep.subr.bf16.mxu0 %v2552
        %2584 = vmatpush1.bf16.msra.mxu0 %v2551
        %2585 = vmatprep.subr.bf16.mxu0 %v2550
        %2586 = vmatpush1.bf16.msra.mxu0 %v2549
        %2587 = vmatprep.subr.bf16.mxu0 %v2548
        %2588 = vmatpush1.bf16.msra.mxu0 %v2547
        %2589 = vmatprep.subr.bf16.mxu0 %v2546
        %2590 = vmatpush1.bf16.msra.mxu0 %v2545
        %2591 = vmatprep.subr.bf16.mxu0 %v2544
        %2592 = vmatpush1.bf16.msra.mxu0 %v2543
        %2593 = vmatprep.subr.bf16.mxu0 %v2542
        %2594 = vmatpush1.bf16.msra.mxu0 %v2541
        %2595 = vmatprep.subr.bf16.mxu0 %v2540
        %2596 = vmatpush1.bf16.msra.mxu0 %v2539
        %2597 = vmatprep.subr.bf16.mxu0 %v2538
        %2598 = vmatpush1.bf16.msra.mxu0 %v2537
        %2599 = vmatprep.subr.bf16.mxu0 0
        %2600 = vmatpush2.bf16.msra.mxu0 0
        %2601 = vmatprep.subr.bf16.mxu0 0
        %2602 = vmatpush2.bf16.msra.mxu0 0
        %2603 = vmatprep.subr.bf16.mxu0 0
        %2604 = vmatpush2.bf16.msra.mxu0 0
        %2605 = vmatprep.subr.bf16.mxu0 0
        %2606 = vmatpush2.bf16.msra.mxu0 0
        %2607 = vmatprep.subr.bf16.mxu0 0
        %2608 = vmatpush2.bf16.msra.mxu0 0
        %2609 = vmatprep.subr.bf16.mxu0 0
        %2610 = vmatpush2.bf16.msra.mxu0 0
        %2611 = vmatprep.subr.bf16.mxu0 %v2556
        %2612 = vmatpush2.bf16.msra.mxu0 %v2555
        %2613 = vmatprep.subr.bf16.mxu0 %v2554
        %2614 = vmatpush2.bf16.msra.mxu0 %v2553
        %2615 = vmatprep.mubr.bf16.mxu0 %v2578
        %2616 = vmatmul.mubr.bf16.gmra.mxu0 %v2471
        %v2617 = vpop.f32.mrf.mxu0
        %v2618 = vadd.f32 0.0, %v2617
        %v2619 = vpop.f32.mrf.mxu0
        %v2620 = vadd.f32 0.0, %v2619
        %v2621 = vpop.f32.mrf.mxu0
        %v2622 = vadd.f32 0.0, %v2621
        %v2623 = vpop.f32.mrf.mxu0
        %v2624 = vadd.f32 0.0, %v2623
        %2625 = vmatprep.mubr.bf16.mxu0 %v2581
        %2626 = vmatmul.mubr.bf16.gmra.mxu0 %v2473
        %v2627 = vpop.f32.mrf.mxu0
        %v2628 = vadd.f32 0.0, %v2627
        %v2629 = vpop.f32.mrf.mxu0
        %v2630 = vadd.f32 0.0, %v2629
        %v2631 = vpop.f32.mrf.mxu0
        %v2632 = vadd.f32 0.0, %v2631
        %v2633 = vpop.f32.mrf.mxu0
        %v2634 = vadd.f32 0.0, %v2633
        %2635 = vdwg.mxu0
        %v2636 = vld [vmem:[%s14] sm:$0xff]
        %v2637 = vld [vmem:[%s14 + $0x8] sm:$0xff]
        %v2638 = vld [vmem:[%s14 + $0x10] sm:$0xff]
        %v2639 = vld [vmem:[%s14 + $0x18] sm:$0xff]
        %2641 = vset.pattern.permute.xlu0 0
        %2642 = vperm.xlu0 %2641, %v2636
        %v2643 = vpop.permute.xlu0 %2642
        %2646 = vset.pattern.permute.xlu0 0
        %2647 = vperm.xlu0 %2646, %v2637
        %v2648 = vpop.permute.xlu0 %2647
        %2651 = vset.pattern.permute.xlu0 0
        %2652 = vperm.xlu0 %2651, %v2638
        %v2653 = vpop.permute.xlu0 %2652
        %2656 = vset.pattern.permute.xlu0 0
        %2657 = vperm.xlu0 %2656, %v2639
        %v2658 = vpop.permute.xlu0 %2657
        %v2660 = vmul.f32 %v2618, %v2643
        %v2661 = vmul.f32 %v2620, %v2643
        %v2662 = vmul.f32 %v2622, %v2648
        %v2663 = vmul.f32 %v2624, %v2648
        %v2664 = vmul.f32 %v2628, %v2653
        %v2665 = vmul.f32 %v2630, %v2653
        %v2666 = vmul.f32 %v2632, %v2658
        %v2667 = vmul.f32 %v2634, %v2658
        %v2668 = vld [vmem:[%s15] sm:$0xff]
        %v2669 = vld [vmem:[%s15 + $0x8] sm:$0xff]
        %v2670 = vld [vmem:[%s15 + $0x10] sm:$0xff]
        %v2671 = vld [vmem:[%s15 + $0x18] sm:$0xff]
        %2673 = vset.pattern.permute.xlu0 0
        %2674 = vperm.xlu0 %2673, %v2668
        %v2675 = vpop.permute.xlu0 %2674
        %2678 = vset.pattern.permute.xlu0 0
        %2679 = vperm.xlu0 %2678, %v2669
        %v2680 = vpop.permute.xlu0 %2679
        %2683 = vset.pattern.permute.xlu0 0
        %2684 = vperm.xlu0 %2683, %v2670
        %v2685 = vpop.permute.xlu0 %2684
        %2688 = vset.pattern.permute.xlu0 0
        %2689 = vperm.xlu0 %2688, %v2671
        %v2690 = vpop.permute.xlu0 %2689
        %v2692 = vadd.f32 %v2660, %v2675
        %v2693 = vadd.f32 %v2661, %v2675
        %v2694 = vadd.f32 %v2662, %v2680
        %v2695 = vadd.f32 %v2663, %v2680
        %v2696 = vadd.f32 %v2664, %v2685
        %v2697 = vadd.f32 %v2665, %v2685
        %v2698 = vadd.f32 %v2666, %v2690
        %v2699 = vadd.f32 %v2667, %v2690
        %v2700 = vadd.f32 %v2692, %v1906
        %v2701 = vadd.f32 %v2693, %v1907
        %v2702 = vadd.f32 %v2694, %v1908
        %v2703 = vadd.f32 %v2695, %v1909
        %v2704 = vadd.f32 %v2696, %v1910
        %v2705 = vadd.f32 %v2697, %v1911
        %v2706 = vadd.f32 %v2698, %v1912
        %v2707 = vadd.f32 %v2699, %v1913
        %v2708 = vmax.f32 %v2700, 0.0
        %v2709 = vmax.f32 %v2701, 0.0
        %v2710 = vmax.f32 %v2702, 0.0
        %v2711 = vmax.f32 %v2703, 0.0
        %v2712 = vmax.f32 %v2704, 0.0
        %v2713 = vmax.f32 %v2705, 0.0
        %v2714 = vmax.f32 %v2706, 0.0
        %v2715 = vmax.f32 %v2707, 0.0
        %2716 = vst [vmem:[%s689] sm:$0xff] %v2708
        %2717 = vst [vmem:[%s689 + $0x8] sm:$0xff] %v2709
        %2718 = vst [vmem:[%s689 + $0x10] sm:$0xff] %v2710
        %2719 = vst [vmem:[%s689 + $0x18] sm:$0xff] %v2711
        %2720 = vst [vmem:[%s689 + $0x20] sm:$0xff] %v2712
        %2721 = vst [vmem:[%s689 + $0x28] sm:$0xff] %v2713
        %2722 = vst [vmem:[%s689 + $0x30] sm:$0xff] %v2714
        %2723 = vst [vmem:[%s689 + $0x38] sm:$0xff] %v2715
        %s2724 = sand.u32 %s386, 1
        %s2725 = scalar_lea.sflag [#allocation5], %s2724
        %s2726 = sand.u32 %s386, 1
        %s2727 = smul.addr %s2726, 64
        %s2728 = scalar_lea.vmem [#allocation23], %s2727
        // Predicated region
        $region133: #{_lambda_.1} parent=83 // pred_check
          %p2729 = pneg %p396
        $region134: #{_lambda_.1} parent=83 // pred_check_branch
          %2731 = sbr.rel (%p2729) target = $region136
        $region135: #{_lambda_.1} parent=83 // pred_region
          %s2733 = ssub.s32 1024, 1024
          %2734 = vsyncadd %s2725, %s2733
          %s2735 = smul.addr %s37, 8
          %s2736 = smul.addr %s2735, 128
          %s2737 = scalar_lea.hbm %s16, %s2736
          %s2738 = sshll.u32 %s2728, 4
          %s2739 = int_to_ptr.vmem [resolvable:$true] %s2738
          %2744 = dma.vmem_to_hbm [thread:$0]  %s2739, 1024, %s2737, %s2725, 256, 256, 16
        $region136: #{_lambda_.1} parent=83 // pred_fallthru
          _
      $region84: #{_lambda_.1} parent=5 // pred_fallthru
        _
      %p2745 = scmp.le.s32.totalorder 2, %s32
      // Predicated region
      $region137: #{_lambda_.1} parent=5 // pred_check
        %p2746 = pneg %p2745
      $region138: #{_lambda_.1} parent=5 // pred_check_branch
        %2748 = sbr.rel (%p2746) target = $region140
      $region139: #{_lambda_.1} parent=5 // pred_region
        %s2749 = ssub.s32 %s32, 2
        // Predicated region
        $region141: #{_lambda_.1} parent=139 // pred_check
          %p2750 = pneg %p402
        $region142: #{_lambda_.1} parent=139 // pred_check_branch
          %2752 = sbr.rel (%p2750) target = $region144
        $region143: #{_lambda_.1} parent=139 // pred_region
          %s2753 = sand.u32 %s387, 1
          %s2754 = scalar_lea.sflag [#allocation5], %s2753
          %s2755 = sand.u32 %s387, 1
          %s2756 = smul.addr %s2755, 64
          %s2757 = scalar_lea.vmem [#allocation23], %s2756
          %2758 = dma.done %s2754, 1024
        $region144: #{_lambda_.1} parent=139 // pred_fallthru
          _
      $region140: #{_lambda_.1} parent=5 // pred_fallthru
        _
    $region6: #{_lambda_.1} parent=1 // loop_footer
      %s36 = sadd.s32 1, %s32
    $region7: #{_lambda_.1} parent=1 // loop_footer_branch
      %31 = sbr.rel target = $region3
    $region8: #{_lambda_.1} parent=1 // loop_exit
      _
    %2759 = vsyncpa [#allocation4], 1
    %s2760 = scalar_lea.sflag [#allocation4], 1
    %2761 = vsyncpa %s2760, 1
    %2762 = vsyncpa [#allocation7], 1
    %2763 = vsyncpa [#allocation10], 1
    %2764 = vsyncpa [#allocation13], 1
    %2765 = vsyncpa [#allocation16], 1
    %2766 = vsyncpa [#allocation19], 1
    %2767 = vsyncpa [#allocation22], 1
    %2768 = vsyncpa [#allocation5], 1
    %s2769 = scalar_lea.sflag [#allocation5], 1
    %2770 = vsyncpa %s2769, 1

</llo_original>
